<compile_context>
chip_gen: v7x
topology: tpu7x:2x2x1
jax: 0.10.0
libtpu: 0.0.40
codegen_flags: <defaults>
</compile_context>

<pallas_src>
import functools

import jax
import jax.numpy as jnp
from jax.experimental import pallas as pl
from jax.experimental.pallas import tpu as pltpu


# ---------------------------------------------------------------------------
# numerics helpers
# ---------------------------------------------------------------------------
_SQRT_HALF = 0.7071067811865476
_SQRT_2_OVER_PI = 0.7978845608028654
_LN_EPS = 1e-5  # torch.nn.LayerNorm default


def _erf(x):
    # float32-accurate erf (Abramowitz & Stegun 7.1.26, |err| < 1.5e-7), built
    # only from ops guaranteed to lower in Mosaic (exp / mul / add / where).
    a1, a2, a3, a4, a5 = (0.254829592, -0.284496736, 1.421413741,
                          -1.453152027, 1.061405429)
    p = 0.3275911
    s = jnp.where(x < 0.0, -1.0, 1.0)
    ax = jnp.abs(x)
    t = 1.0 / (1.0 + p * ax)
    poly = ((((a5 * t + a4) * t + a3) * t + a2) * t + a1) * t
    return s * (1.0 - poly * jnp.exp(-ax * ax))


def _gelu(x, approximate):
    if approximate:
        # tanh-approx GELU: runs on the EUP slot (relieves the VALU).
        return 0.5 * x * (1.0 + jnp.tanh(
            _SQRT_2_OVER_PI * (x + 0.044715 * x * x * x)))
    # Exact (erf-based) GELU, matching torch.nn.GELU() default.
    return 0.5 * x * (1.0 + _erf(x * _SQRT_HALF))


def _mm(a, b, use_bf16):
    # MXU matmul, f32 accumulate.  Weights are pre-cast to bf16 in the
    # wrapper; only the activation operand is cast here.
    if use_bf16:
        a = a.astype(jnp.bfloat16)
        b = b.astype(jnp.bfloat16)
    return jnp.dot(a, b, preferred_element_type=jnp.float32)


def _round_up(a, b):
    return ((a + b - 1) // b) * b


def _vmem_need_bytes(tm, in_dim, half, h2, h4, nb_pad, act_bytes, w_bytes):
    # Rough per-kernel VMEM need (2x for default double buffering everywhere).
    f32 = 4
    need_a = 2 * (tm * f32                          # batch-id row
                  + tm * in_dim * f32               # x tile
                  + 2 * in_dim * f32                # LN gamma / beta
                  + 2 * in_dim * half * w_bytes     # W1a, W1b
                  + 2 * half * f32                  # b1a, b1b
                  + tm * half * act_bytes           # z_local out
                  + nb_pad * half * f32)            # psum out
    need_b = 2 * (tm * f32                          # batch-id col
                  + tm * half * act_bytes           # z_local in
                  + nb_pad * h2 * f32               # mproj (mean @ W2b)
                  + half * h2 * w_bytes + h2 * f32  # W2a, b2
                  + h2 * h4 * w_bytes + h4 * f32    # W3, b3
                  + h4 * f32 + f32                  # w4 row, b4
                  + tm * f32)                       # lane-dense out row
    return max(need_a, need_b)


# ---------------------------------------------------------------------------
# Kernel A: LayerNorm -> split Linear (local / global halves) -> GELU,
#           plus per-tile partial batch sums of the GLOBAL half via a one-hot
#           MXU matmul.  Only z_local is written back to HBM.
# ---------------------------------------------------------------------------
def _layer1_kernel(bid_ref, x_ref, ln_g_ref, ln_b_ref,
                   w1a_ref, b1a_ref, w1b_ref, b1b_ref,
                   z_ref, psum_ref, *, use_bf16, approx_gelu):
    x = x_ref[...]                                               # (tm, in_dim)
    mu = jnp.mean(x, axis=-1, keepdims=True)
    # one-pass variance: mean(x^2) - mu^2 (biased, like torch.nn.LayerNorm)
    var = jnp.maximum(jnp.mean(x * x, axis=-1, keepdims=True) - mu * mu, 0.0)
    xn = (x - mu) * jax.lax.rsqrt(var + _LN_EPS)
    xn = xn * ln_g_ref[...] + ln_b_ref[...]

    z_local = _gelu(_mm(xn, w1a_ref[...], use_bf16) + b1a_ref[...], approx_gelu)
    z_global = _gelu(_mm(xn, w1b_ref[...], use_bf16) + b1b_ref[...], approx_gelu)
    z_ref[...] = z_local.astype(z_ref.dtype)                     # (tm, half)

    # Per-tile partial segment sums of the global half:
    #   one_hot(B_pad, tm) @ z_global -> (B_pad, half).
    # Padding rows carry an out-of-range batch id, so they match no row.
    bids = bid_ref[...]                                          # (1, tm) int32
    nbp = psum_ref.shape[1]
    tm = bids.shape[1]
    one_hot = (bids == jax.lax.broadcasted_iota(
        jnp.int32, (nbp, tm), 0)).astype(jnp.float32)            # (B_pad, tm)
    psum_ref[...] = jnp.dot(one_hot, z_global,
                            preferred_element_type=jnp.float32)[None]


# ---------------------------------------------------------------------------
# Kernel B: h = GELU(z_local @ W2a + gather(mproj) + b2) -> GELU(h @ W3 + b3)
#           -> final layer as an NT matmul producing a lane-dense (1, tm) row.
# ---------------------------------------------------------------------------
def _mask_mlp_kernel(bid_ref, z_ref, mproj_ref, w2a_ref, b2_ref,
                     w3_ref, b3_ref, w4r_ref, b4_ref, out_ref,
                     *, use_bf16, approx_gelu):
    z = z_ref[...]                                               # (tm, half)
    tm = z.shape[0]
    nbp = mproj_ref.shape[0]

    bids = bid_ref[...]                                          # (tm, 1) int32
    one_hot = (bids == jax.lax.broadcasted_iota(
        jnp.int32, (tm, nbp), 1)).astype(jnp.float32)            # (tm, B_pad)
    # Gather each row's pre-projected batch mean: (tm, B_pad) @ (B_pad, h2).
    contrib = jnp.dot(one_hot, mproj_ref[...],
                      preferred_element_type=jnp.float32)        # (tm, h2)

    h = _gelu(_mm(z, w2a_ref[...], use_bf16) + contrib + b2_ref[...], approx_gelu)
    h = _gelu(_mm(h, w3_ref[...], use_bf16) + b3_ref[...], approx_gelu)

    # Final layer: contract w4 row (1, h4) with h (tm, h4) over features,
    # producing a lane-dense (1, tm) output row (no (tm, 1) masked stores).
    out = jnp.einsum("ok,tk->ot", w4r_ref[...], h,
                     preferred_element_type=jnp.float32)         # (1, tm)
    out_ref[...] = out + b4_ref[...]


# ---------------------------------------------------------------------------
# Wrapper (padding, per-row batch ids, parameter plumbing)
# ---------------------------------------------------------------------------
def sparse_mask_predictor_forward(params, x, batch_offsets, *,
                                  tm_max=1024, use_bf16_matmul=True,
                                  approximate_gelu=False):
    n, in_dim = x.shape
    hidden = params["w1"].shape[1]
    half = hidden // 2
    h2 = hidden // 2
    h4 = hidden // 4
    nb = int(batch_offsets.shape[0])
    nb_pad = max(8, _round_up(nb, 8))        # pad batch axis to sublane multiple

    act_dtype = jnp.bfloat16 if use_bf16_matmul else jnp.float32
    act_bytes = 2 if use_bf16_matmul else 4
    w_bytes = 2 if use_bf16_matmul else 4

    # Row tile: multiple of 128, as large as the VMEM budget allows.
    tm = min(tm_max, _round_up(max(n, 1), 128))
    while tm > 128 and _vmem_need_bytes(tm, in_dim, half, h2, h4, nb_pad,
                                        act_bytes, w_bytes) > 40 * 2**20:
        tm -= 128
    n_pad = _round_up(n, tm)
    n_tiles = n_pad // tm
    grid = (n_tiles,)

    need = _vmem_need_bytes(tm, in_dim, half, h2, h4, nb_pad, act_bytes, w_bytes)
    # Cap at 48 MiB so we never request the full 64 MiB of a v7x TensorCore.
    vmem_limit = int(min(48 * 2**20, max(32 * 2**20, 2 * need)))

    x_p = jnp.pad(x, ((0, n_pad - n), (0, 0))) if n_pad != n else x

    # Per-row batch id (padding rows -> out-of-range id nb_pad, excluded).
    offs = batch_offsets.astype(jnp.int32)
    row_ids = jnp.arange(n_pad, dtype=jnp.int32)
    bid = jnp.searchsorted(offs, row_ids, side="right").astype(jnp.int32) - 1
    bid = jnp.where(row_ids < n, bid, nb_pad)
    bid_row = bid.reshape(1, n_pad)          # lane-major view (kernel A)
    bid_col = bid.reshape(n_pad, 1)          # sublane-major view (kernel B)

    # Per-batch inverse counts (dummy padded batches -> 0 => mean 0).
    offs_ext = jnp.concatenate([offs, jnp.array([n], jnp.int32)])
    counts = (offs_ext[1:] - offs_ext[:-1]).astype(jnp.float32)
    inv_cnt = jnp.zeros((nb_pad,), jnp.float32).at[:nb].set(
        1.0 / jnp.maximum(counts, 1.0)).reshape(nb_pad, 1)

    # Split parameters: W1 into local/global output halves, W2 into the rows
    # multiplying the local half (w2a) and the per-batch-mean half (w2b).
    w1a, w1b = params["w1"][:, :half], params["w1"][:, half:]
    b1a, b1b = params["b1"][:, :half], params["b1"][:, half:]
    w2a, w2b = params["w2"][:half, :], params["w2"][half:, :]
    w3, b3 = params["w3"], params["b3"]
    w4r = params["w4"].reshape(1, h4)        # w4 as a row -> lane-dense output
    b4 = params["b4"]                        # (1, 1)

    if use_bf16_matmul:
        # Pre-cast MXU weight operands once in HBM (halves weight DMA too).
        w1a = w1a.astype(jnp.bfloat16)
        w1b = w1b.astype(jnp.bfloat16)
        w2a = w2a.astype(jnp.bfloat16)
        w3 = w3.astype(jnp.bfloat16)

    cparams = pltpu.CompilerParams(
        dimension_semantics=("parallel",),
        vmem_limit_bytes=vmem_limit)

    # ---- Kernel A: layer1 + per-tile partial batch sums of the global half ----
    k1 = functools.partial(_layer1_kernel, use_bf16=use_bf16_matmul,
                           approx_gelu=approximate_gelu)
    z_local, psums = pl.pallas_call(
        k1,
        out_shape=(jax.ShapeDtypeStruct((n_pad, half), act_dtype),
                   jax.ShapeDtypeStruct((n_tiles, nb_pad, half), jnp.float32)),
        grid=grid,
        in_specs=[
            pl.BlockSpec((1, tm), lambda i: (0, i)),            # row batch ids
            pl.BlockSpec((tm, in_dim), lambda i: (i, 0)),       # x tile
            pl.BlockSpec((1, in_dim), lambda i: (0, 0)),        # ln gamma
            pl.BlockSpec((1, in_dim), lambda i: (0, 0)),        # ln beta
            pl.BlockSpec((in_dim, half), lambda i: (0, 0)),     # W1a (resident)
            pl.BlockSpec((1, half), lambda i: (0, 0)),          # b1a
            pl.BlockSpec((in_dim, half), lambda i: (0, 0)),     # W1b (resident)
            pl.BlockSpec((1, half), lambda i: (0, 0)),          # b1b
        ],
        out_specs=[
            pl.BlockSpec((tm, half), lambda i: (i, 0)),             # z_local
            pl.BlockSpec((1, nb_pad, half), lambda i: (i, 0, 0)),   # partial sums
        ],
        compiler_params=cparams,
    )(bid_row, x_p, params["ln_g"], params["ln_b"], w1a, b1a, w1b, b1b)

    # Tiny XLA glue: per-batch means of the global half, pre-projected
    # through W2's second-half rows so Kernel B only needs a gather + add.
    means = jnp.sum(psums, axis=0) * inv_cnt                     # (nb_pad, half)
    mproj = jnp.dot(means, w2b, precision=jax.lax.Precision.HIGHEST,
                    preferred_element_type=jnp.float32)          # (nb_pad, h2)

    # ---- Kernel B: mean-mixing + 3-layer MLP, lane-dense (1, n_pad) output ----
    k2 = functools.partial(_mask_mlp_kernel, use_bf16=use_bf16_matmul,
                           approx_gelu=approximate_gelu)
    out = pl.pallas_call(
        k2,
        out_shape=jax.ShapeDtypeStruct((1, n_pad), jnp.float32),
        grid=grid,
        in_specs=[
            pl.BlockSpec((tm, 1), lambda i: (i, 0)),            # row batch ids
            pl.BlockSpec((tm, half), lambda i: (i, 0)),         # z_local tile
            pl.BlockSpec((nb_pad, h2), lambda i: (0, 0)),       # mproj (resident)
            pl.BlockSpec((half, h2), lambda i: (0, 0)),         # W2a
            pl.BlockSpec((1, h2), lambda i: (0, 0)),            # b2
            pl.BlockSpec((h2, h4), lambda i: (0, 0)),           # W3
            pl.BlockSpec((1, h4), lambda i: (0, 0)),            # b3
            pl.BlockSpec((1, h4), lambda i: (0, 0)),            # w4 row
            pl.BlockSpec((1, 1), lambda i: (0, 0)),             # b4
        ],
        out_specs=pl.BlockSpec((1, tm), lambda i: (0, i)),
        compiler_params=cparams,
    )(bid_col, z_local, mproj, w2a, params["b2"], w3, b3, w4r, b4)

    return out[0, :n, None]                                     # (n, 1)


# ---------------------------------------------------------------------------
# Deterministic parameter init (shapes from SparseMaskPredictor.__init__)
# ---------------------------------------------------------------------------
def init_params(key, in_dim, hidden_dim):
    ks = jax.random.split(key, 4)

    def linear(k, fin, fout):
        kw, kb = jax.random.split(k)
        bound = 1.0 / (fin ** 0.5)
        w = jax.random.uniform(kw, (fin, fout), jnp.float32, -bound, bound)
        b = jax.random.uniform(kb, (1, fout), jnp.float32, -bound, bound)
        return w, b

    w1, b1 = linear(ks[0], in_dim, hidden_dim)
    w2, b2 = linear(ks[1], hidden_dim, hidden_dim // 2)
    w3, b3 = linear(ks[2], hidden_dim // 2, hidden_dim // 4)
    w4, b4 = linear(ks[3], hidden_dim // 4, 1)
    return dict(
        ln_g=jnp.ones((1, in_dim), jnp.float32),
        ln_b=jnp.zeros((1, in_dim), jnp.float32),
        w1=w1, b1=b1, w2=w2, b2=b2, w3=w3, b3=b3, w4=w4, b4=b4)


# ---------------------------------------------------------------------------
# Pure-JAX reference (torch semantics: cat([local, batch-mean]) then full MLP)
# ---------------------------------------------------------------------------
def reference_forward(params, x, batch_offsets):
    mu = jnp.mean(x, -1, keepdims=True)
    var = jnp.mean((x - mu) ** 2, -1, keepdims=True)
    xn = (x - mu) / jnp.sqrt(var + _LN_EPS) * params["ln_g"] + params["ln_b"]
    z = _gelu(xn @ params["w1"] + params["b1"], approximate=False)
    hidden = params["w1"].shape[1]
    half = hidden // 2
    n = x.shape[0]
    offs = [int(o) for o in batch_offsets.tolist()] + [n]
    pieces = []
    for b in range(len(offs) - 1):
        zb = z[offs[b]:offs[b + 1]]
        zl, zg = zb[:, :half], zb[:, half:]
        zg = jnp.broadcast_to(jnp.mean(zg, axis=0, keepdims=True), zl.shape)
        pieces.append(jnp.concatenate([zl, zg], -1))
    z2 = jnp.concatenate(pieces, 0)
    h = _gelu(z2 @ params["w2"] + params["b2"], approximate=False)
    h = _gelu(h @ params["w3"] + params["b3"], approximate=False)
    return h @ params["w4"] + params["b4"]


if __name__ == "__main__":
    key = jax.random.PRNGKey(0)
    in_dim, hidden_dim = 32, 32
    n_tokens = 24                                     # total tokens across batches
    batch_offsets = jnp.array([0, 7, 15], jnp.int32)  # 3 batches of 7, 8, 9 tokens

    kx, kp = jax.random.split(key)
    x = jax.random.normal(kx, (n_tokens, in_dim), jnp.float32)
    params = init_params(kp, in_dim, hidden_dim)

    ref = reference_forward(params, x, batch_offsets)

    # 1) exact-parity path: f32 MXU operands, erf GELU.
    out = sparse_mask_predictor_forward(
        params, x, batch_offsets, use_bf16_matmul=False, approximate_gelu=False)
    out = jax.block_until_ready(out)
    assert out.shape == (n_tokens, 1) and out.dtype == jnp.float32
    assert bool(jnp.all(jnp.isfinite(out)))
    max_err = float(jnp.max(jnp.abs(out - ref)))
    if max_err > 2e-4:
        raise AssertionError(f"fp32 kernel/reference mismatch: max_err={max_err}")

    # 2) fast path: bf16 MXU operands + bf16 z storage + tanh GELU.
    out_fast = sparse_mask_predictor_forward(
        params, x, batch_offsets, use_bf16_matmul=True, approximate_gelu=True)
    out_fast = jax.block_until_ready(out_fast)
    assert out_fast.shape == (n_tokens, 1)
    assert bool(jnp.all(jnp.isfinite(out_fast)))
    max_err_fast = float(jnp.max(jnp.abs(out_fast - ref)))
    if max_err_fast > 1e-1:
        raise AssertionError(f"bf16 kernel/reference mismatch: max_err={max_err_fast}")

    print("KERNEL_OK")
</pallas_src>

<mosaic_0001>
module attributes {stable_mosaic.version = 11 : i64} {
  func.func @_layer1_kernel(%arg0: i32, %arg1: memref<1x128xi32, #tpu.memory_space<vmem>>, %arg2: memref<128x32xf32, #tpu.memory_space<vmem>>, %arg3: memref<1x32xf32, #tpu.memory_space<vmem>>, %arg4: memref<1x32xf32, #tpu.memory_space<vmem>>, %arg5: memref<32x16xf32, #tpu.memory_space<vmem>>, %arg6: memref<1x16xf32, #tpu.memory_space<vmem>>, %arg7: memref<32x16xf32, #tpu.memory_space<vmem>>, %arg8: memref<1x16xf32, #tpu.memory_space<vmem>>, %arg9: memref<128x16xf32, #tpu.memory_space<vmem>>, %arg10: memref<1x8x16xf32, #tpu.memory_space<vmem>>) attributes {dimension_semantics = [#tpu.dimension_semantics<parallel>], iteration_bounds = array<i64: 1>, scalar_prefetch = 0 : i64, scratch_operands = 0 : i64, tpu.core_type = #tpu.core_type<tc>, window_params = [{transform_indices = @transform_0, window_bounds = array<i64: 1, 128>}, {transform_indices = @transform_1, window_bounds = array<i64: 128, 32>}, {pipeline_mode = #tpu.pipeline_mode<synchronous>, transform_indices = @transform_2, window_bounds = array<i64: 1, 32>}, {pipeline_mode = #tpu.pipeline_mode<synchronous>, transform_indices = @transform_3, window_bounds = array<i64: 1, 32>}, {pipeline_mode = #tpu.pipeline_mode<synchronous>, transform_indices = @transform_4, window_bounds = array<i64: 32, 16>}, {pipeline_mode = #tpu.pipeline_mode<synchronous>, transform_indices = @transform_5, window_bounds = array<i64: 1, 16>}, {pipeline_mode = #tpu.pipeline_mode<synchronous>, transform_indices = @transform_6, window_bounds = array<i64: 32, 16>}, {pipeline_mode = #tpu.pipeline_mode<synchronous>, transform_indices = @transform_7, window_bounds = array<i64: 1, 16>}, {transform_indices = @transform_8, window_bounds = array<i64: 128, 16>}, {transform_indices = @transform_9, window_bounds = array<i64: 1, 8, 16>}]} {
    %c0 = arith.constant 0 : index
    %c0_0 = arith.constant 0 : index
    %0 = vector.load %arg2[%c0, %c0_0] : memref<128x32xf32, #tpu.memory_space<vmem>>, vector<128x32xf32>
    %cst = arith.constant dense<0.000000e+00> : vector<128xf32>
    %1 = vector.multi_reduction <add>, %0, %cst [1] : vector<128x32xf32> to vector<128xf32>
    %2 = vector.shape_cast %1 : vector<128xf32> to vector<128x1xf32>
    %cst_1 = arith.constant 3.200000e+01 : f32
    %3 = vector.broadcast %cst_1 : f32 to vector<128x1xf32>
    %4 = arith.divf %2, %3 : vector<128x1xf32>
    %5 = arith.mulf %0, %0 : vector<128x32xf32>
    %cst_2 = arith.constant dense<0.000000e+00> : vector<128xf32>
    %6 = vector.multi_reduction <add>, %5, %cst_2 [1] : vector<128x32xf32> to vector<128xf32>
    %7 = vector.shape_cast %6 : vector<128xf32> to vector<128x1xf32>
    %cst_3 = arith.constant 3.200000e+01 : f32
    %8 = vector.broadcast %cst_3 : f32 to vector<128x1xf32>
    %9 = arith.divf %7, %8 : vector<128x1xf32>
    %10 = arith.mulf %4, %4 : vector<128x1xf32>
    %11 = arith.subf %9, %10 : vector<128x1xf32>
    %cst_4 = arith.constant 0.000000e+00 : f32
    %12 = vector.broadcast %cst_4 : f32 to vector<128x1xf32>
    %13 = arith.maximumf %11, %12 : vector<128x1xf32>
    %14 = vector.broadcast %4 : vector<128x1xf32> to vector<128x32xf32>
    %15 = arith.subf %0, %14 : vector<128x32xf32>
    %cst_5 = arith.constant 9.99999974E-6 : f32
    %16 = vector.broadcast %cst_5 : f32 to vector<128x1xf32>
    %17 = arith.addf %13, %16 : vector<128x1xf32>
    %18 = math.rsqrt %17 : vector<128x1xf32>
    %19 = vector.broadcast %18 : vector<128x1xf32> to vector<128x32xf32>
    %20 = arith.mulf %15, %19 : vector<128x32xf32>
    %c0_6 = arith.constant 0 : index
    %c0_7 = arith.constant 0 : index
    %21 = vector.load %arg3[%c0_6, %c0_7] : memref<1x32xf32, #tpu.memory_space<vmem>>, vector<1x32xf32>
    %22 = vector.broadcast %21 : vector<1x32xf32> to vector<128x32xf32>
    %23 = arith.mulf %20, %22 : vector<128x32xf32>
    %c0_8 = arith.constant 0 : index
    %c0_9 = arith.constant 0 : index
    %24 = vector.load %arg4[%c0_8, %c0_9] : memref<1x32xf32, #tpu.memory_space<vmem>>, vector<1x32xf32>
    %25 = vector.broadcast %24 : vector<1x32xf32> to vector<128x32xf32>
    %26 = arith.addf %23, %25 : vector<128x32xf32>
    %c0_10 = arith.constant 0 : index
    %c0_11 = arith.constant 0 : index
    %27 = vector.load %arg5[%c0_10, %c0_11] : memref<32x16xf32, #tpu.memory_space<vmem>>, vector<32x16xf32>
    %cst_12 = arith.constant dense<0.000000e+00> : vector<128x16xf32>
    %28 = tpu.matmul %26, %27, %cst_12 {dimension_numbers = #tpu.dot_dimension_numbers<[1], [0], [0], [1], [0, 0, 1, 1], [], []>} : vector<128x32xf32>, vector<32x16xf32>, vector<128x16xf32> -> vector<128x16xf32>
    %c0_13 = arith.constant 0 : index
    %c0_14 = arith.constant 0 : index
    %29 = vector.load %arg6[%c0_13, %c0_14] : memref<1x16xf32, #tpu.memory_space<vmem>>, vector<1x16xf32>
    %30 = vector.broadcast %29 : vector<1x16xf32> to vector<128x16xf32>
    %31 = arith.addf %28, %30 : vector<128x16xf32>
    %cst_15 = arith.constant 5.000000e-01 : f32
    %32 = vector.broadcast %cst_15 : f32 to vector<128x16xf32>
    %33 = arith.mulf %32, %31 : vector<128x16xf32>
    %cst_16 = arith.constant 0.707106769 : f32
    %34 = vector.broadcast %cst_16 : f32 to vector<128x16xf32>
    %35 = arith.mulf %31, %34 : vector<128x16xf32>
    %cst_17 = arith.constant 0.000000e+00 : f32
    %36 = vector.broadcast %cst_17 : f32 to vector<128x16xf32>
    %37 = arith.cmpf olt, %35, %36 : vector<128x16xf32>
    %cst_18 = arith.constant -1.000000e+00 : f32
    %cst_19 = arith.constant 1.000000e+00 : f32
    %38 = vector.broadcast %cst_18 : f32 to vector<128x16xf32>
    %39 = vector.broadcast %cst_19 : f32 to vector<128x16xf32>
    %40 = arith.select %37, %38, %39 : vector<128x16xi1>, vector<128x16xf32>
    %41 = math.absf %35 : vector<128x16xf32>
    %cst_20 = arith.constant 0.327591091 : f32
    %42 = vector.broadcast %cst_20 : f32 to vector<128x16xf32>
    %43 = arith.mulf %42, %41 : vector<128x16xf32>
    %cst_21 = arith.constant 1.000000e+00 : f32
    %44 = vector.broadcast %cst_21 : f32 to vector<128x16xf32>
    %45 = arith.addf %44, %43 : vector<128x16xf32>
    %cst_22 = arith.constant 1.000000e+00 : f32
    %46 = vector.broadcast %cst_22 : f32 to vector<128x16xf32>
    %47 = arith.divf %46, %45 : vector<128x16xf32>
    %cst_23 = arith.constant 1.06140542 : f32
    %48 = vector.broadcast %cst_23 : f32 to vector<128x16xf32>
    %49 = arith.mulf %48, %47 : vector<128x16xf32>
    %cst_24 = arith.constant -1.45315206 : f32
    %50 = vector.broadcast %cst_24 : f32 to vector<128x16xf32>
    %51 = arith.addf %49, %50 : vector<128x16xf32>
    %52 = arith.mulf %51, %47 : vector<128x16xf32>
    %cst_25 = arith.constant 1.42141378 : f32
    %53 = vector.broadcast %cst_25 : f32 to vector<128x16xf32>
    %54 = arith.addf %52, %53 : vector<128x16xf32>
    %55 = arith.mulf %54, %47 : vector<128x16xf32>
    %cst_26 = arith.constant -0.284496725 : f32
    %56 = vector.broadcast %cst_26 : f32 to vector<128x16xf32>
    %57 = arith.addf %55, %56 : vector<128x16xf32>
    %58 = arith.mulf %57, %47 : vector<128x16xf32>
    %cst_27 = arith.constant 0.254829586 : f32
    %59 = vector.broadcast %cst_27 : f32 to vector<128x16xf32>
    %60 = arith.addf %58, %59 : vector<128x16xf32>
    %61 = arith.mulf %60, %47 : vector<128x16xf32>
    %cst_28 = arith.constant 0.000000e+00 : f32
    %62 = vector.broadcast %cst_28 : f32 to vector<128x16xf32>
    %63 = arith.subf %62, %41 : vector<128x16xf32>
    %64 = arith.mulf %63, %41 : vector<128x16xf32>
    %65 = math.exp %64 : vector<128x16xf32>
    %66 = arith.mulf %61, %65 : vector<128x16xf32>
    %cst_29 = arith.constant 1.000000e+00 : f32
    %67 = vector.broadcast %cst_29 : f32 to vector<128x16xf32>
    %68 = arith.subf %67, %66 : vector<128x16xf32>
    %69 = arith.mulf %40, %68 : vector<128x16xf32>
    %cst_30 = arith.constant 1.000000e+00 : f32
    %70 = vector.broadcast %cst_30 : f32 to vector<128x16xf32>
    %71 = arith.addf %70, %69 : vector<128x16xf32>
    %72 = arith.mulf %33, %71 : vector<128x16xf32>
    %c0_31 = arith.constant 0 : index
    %c0_32 = arith.constant 0 : index
    %73 = vector.load %arg7[%c0_31, %c0_32] : memref<32x16xf32, #tpu.memory_space<vmem>>, vector<32x16xf32>
    %cst_33 = arith.constant dense<0.000000e+00> : vector<128x16xf32>
    %74 = tpu.matmul %26, %73, %cst_33 {dimension_numbers = #tpu.dot_dimension_numbers<[1], [0], [0], [1], [0, 0, 1, 1], [], []>} : vector<128x32xf32>, vector<32x16xf32>, vector<128x16xf32> -> vector<128x16xf32>
    %c0_34 = arith.constant 0 : index
    %c0_35 = arith.constant 0 : index
    %75 = vector.load %arg8[%c0_34, %c0_35] : memref<1x16xf32, #tpu.memory_space<vmem>>, vector<1x16xf32>
    %76 = vector.broadcast %75 : vector<1x16xf32> to vector<128x16xf32>
    %77 = arith.addf %74, %76 : vector<128x16xf32>
    %cst_36 = arith.constant 5.000000e-01 : f32
    %78 = vector.broadcast %cst_36 : f32 to vector<128x16xf32>
    %79 = arith.mulf %78, %77 : vector<128x16xf32>
    %cst_37 = arith.constant 0.707106769 : f32
    %80 = vector.broadcast %cst_37 : f32 to vector<128x16xf32>
    %81 = arith.mulf %77, %80 : vector<128x16xf32>
    %cst_38 = arith.constant 0.000000e+00 : f32
    %82 = vector.broadcast %cst_38 : f32 to vector<128x16xf32>
    %83 = arith.cmpf olt, %81, %82 : vector<128x16xf32>
    %cst_39 = arith.constant -1.000000e+00 : f32
    %cst_40 = arith.constant 1.000000e+00 : f32
    %84 = vector.broadcast %cst_39 : f32 to vector<128x16xf32>
    %85 = vector.broadcast %cst_40 : f32 to vector<128x16xf32>
    %86 = arith.select %83, %84, %85 : vector<128x16xi1>, vector<128x16xf32>
    %87 = math.absf %81 : vector<128x16xf32>
    %cst_41 = arith.constant 0.327591091 : f32
    %88 = vector.broadcast %cst_41 : f32 to vector<128x16xf32>
    %89 = arith.mulf %88, %87 : vector<128x16xf32>
    %cst_42 = arith.constant 1.000000e+00 : f32
    %90 = vector.broadcast %cst_42 : f32 to vector<128x16xf32>
    %91 = arith.addf %90, %89 : vector<128x16xf32>
    %cst_43 = arith.constant 1.000000e+00 : f32
    %92 = vector.broadcast %cst_43 : f32 to vector<128x16xf32>
    %93 = arith.divf %92, %91 : vector<128x16xf32>
    %cst_44 = arith.constant 1.06140542 : f32
    %94 = vector.broadcast %cst_44 : f32 to vector<128x16xf32>
    %95 = arith.mulf %94, %93 : vector<128x16xf32>
    %cst_45 = arith.constant -1.45315206 : f32
    %96 = vector.broadcast %cst_45 : f32 to vector<128x16xf32>
    %97 = arith.addf %95, %96 : vector<128x16xf32>
    %98 = arith.mulf %97, %93 : vector<128x16xf32>
    %cst_46 = arith.constant 1.42141378 : f32
    %99 = vector.broadcast %cst_46 : f32 to vector<128x16xf32>
    %100 = arith.addf %98, %99 : vector<128x16xf32>
    %101 = arith.mulf %100, %93 : vector<128x16xf32>
    %cst_47 = arith.constant -0.284496725 : f32
    %102 = vector.broadcast %cst_47 : f32 to vector<128x16xf32>
    %103 = arith.addf %101, %102 : vector<128x16xf32>
    %104 = arith.mulf %103, %93 : vector<128x16xf32>
    %cst_48 = arith.constant 0.254829586 : f32
    %105 = vector.broadcast %cst_48 : f32 to vector<128x16xf32>
    %106 = arith.addf %104, %105 : vector<128x16xf32>
    %107 = arith.mulf %106, %93 : vector<128x16xf32>
    %cst_49 = arith.constant 0.000000e+00 : f32
    %108 = vector.broadcast %cst_49 : f32 to vector<128x16xf32>
    %109 = arith.subf %108, %87 : vector<128x16xf32>
    %110 = arith.mulf %109, %87 : vector<128x16xf32>
    %111 = math.exp %110 : vector<128x16xf32>
    %112 = arith.mulf %107, %111 : vector<128x16xf32>
    %cst_50 = arith.constant 1.000000e+00 : f32
    %113 = vector.broadcast %cst_50 : f32 to vector<128x16xf32>
    %114 = arith.subf %113, %112 : vector<128x16xf32>
    %115 = arith.mulf %86, %114 : vector<128x16xf32>
    %cst_51 = arith.constant 1.000000e+00 : f32
    %116 = vector.broadcast %cst_51 : f32 to vector<128x16xf32>
    %117 = arith.addf %116, %115 : vector<128x16xf32>
    %118 = arith.mulf %79, %117 : vector<128x16xf32>
    %c0_52 = arith.constant 0 : index
    %c0_53 = arith.constant 0 : index
    %119 = vector.load %arg9[%c0_52, %c0_53] : memref<128x16xf32, #tpu.memory_space<vmem>>, vector<128x16xf32>
    tpu.vector_store %arg9[%c0_52, %c0_53], %72 {strides = array<i32>} : memref<128x16xf32, #tpu.memory_space<vmem>>, vector<128x16xf32>,
    %c0_54 = arith.constant 0 : index
    %c0_55 = arith.constant 0 : index
    %120 = vector.load %arg1[%c0_54, %c0_55] : memref<1x128xi32, #tpu.memory_space<vmem>>, vector<1x128xi32>
    %121 = tpu.iota {dimensions = array<i32: 0>} : vector<8x128xi32>
    %122 = vector.broadcast %120 : vector<1x128xi32> to vector<8x128xi32>
    %123 = arith.cmpi eq, %122, %121 : vector<8x128xi32>
    %124 = arith.extui %123 : vector<8x128xi1> to vector<8x128xi32>
    %125 = arith.sitofp %124 : vector<8x128xi32> to vector<8x128xf32>
    %cst_56 = arith.constant dense<0.000000e+00> : vector<8x16xf32>
    %126 = tpu.matmul %125, %118, %cst_56 {dimension_numbers = #tpu.dot_dimension_numbers<[1], [0], [0], [1], [0, 0, 1, 1], [], []>} : vector<8x128xf32>, vector<128x16xf32>, vector<8x16xf32> -> vector<8x16xf32>
    %127 = vector.shape_cast %126 : vector<8x16xf32> to vector<1x8x16xf32>
    %c0_57 = arith.constant 0 : index
    %c0_58 = arith.constant 0 : index
    %c0_59 = arith.constant 0 : index
    %128 = vector.load %arg10[%c0_57, %c0_58, %c0_59] : memref<1x8x16xf32, #tpu.memory_space<vmem>>, vector<1x8x16xf32>
    tpu.vector_store %arg10[%c0_57, %c0_58, %c0_59], %127 {strides = array<i32>} : memref<1x8x16xf32, #tpu.memory_space<vmem>>, vector<1x8x16xf32>,
    return
  }
  func.func @transform_0(%arg0: i32) -> (i32, i32) {
    %c0_i32 = arith.constant 0 : i32
    %c0_i32_0 = arith.constant 0 : i32
    return %c0_i32, %arg0 : i32, i32
  }
  func.func @transform_1(%arg0: i32) -> (i32, i32) {
    %c0_i32 = arith.constant 0 : i32
    %c0_i32_0 = arith.constant 0 : i32
    return %arg0, %c0_i32 : i32, i32
  }
  func.func @transform_2(%arg0: i32) -> (i32, i32) {
    %c0_i32 = arith.constant 0 : i32
    %c0_i32_0 = arith.constant 0 : i32
    %c0_i32_1 = arith.constant 0 : i32
    return %c0_i32, %c0_i32_0 : i32, i32
  }
  func.func @transform_3(%arg0: i32) -> (i32, i32) {
    %c0_i32 = arith.constant 0 : i32
    %c0_i32_0 = arith.constant 0 : i32
    %c0_i32_1 = arith.constant 0 : i32
    return %c0_i32, %c0_i32_0 : i32, i32
  }
  func.func @transform_4(%arg0: i32) -> (i32, i32) {
    %c0_i32 = arith.constant 0 : i32
    %c0_i32_0 = arith.constant 0 : i32
    %c0_i32_1 = arith.constant 0 : i32
    return %c0_i32, %c0_i32_0 : i32, i32
  }
  func.func @transform_5(%arg0: i32) -> (i32, i32) {
    %c0_i32 = arith.constant 0 : i32
    %c0_i32_0 = arith.constant 0 : i32
    %c0_i32_1 = arith.constant 0 : i32
    return %c0_i32, %c0_i32_0 : i32, i32
  }
  func.func @transform_6(%arg0: i32) -> (i32, i32) {
    %c0_i32 = arith.constant 0 : i32
    %c0_i32_0 = arith.constant 0 : i32
    %c0_i32_1 = arith.constant 0 : i32
    return %c0_i32, %c0_i32_0 : i32, i32
  }
  func.func @transform_7(%arg0: i32) -> (i32, i32) {
    %c0_i32 = arith.constant 0 : i32
    %c0_i32_0 = arith.constant 0 : i32
    %c0_i32_1 = arith.constant 0 : i32
    return %c0_i32, %c0_i32_0 : i32, i32
  }
  func.func @transform_8(%arg0: i32) -> (i32, i32) {
    %c0_i32 = arith.constant 0 : i32
    %c0_i32_0 = arith.constant 0 : i32
    return %arg0, %c0_i32 : i32, i32
  }
  func.func @transform_9(%arg0: i32) -> (i32, i32, i32) {
    %c0_i32 = arith.constant 0 : i32
    %c0_i32_0 = arith.constant 0 : i32
    %c0_i32_1 = arith.constant 0 : i32
    return %arg0, %c0_i32, %c0_i32_0 : i32, i32, i32
  }
}

</mosaic_0001>

<llo_original>
// kernel: tpu_custom_call.1
$region0: #{tpu_custom_call.1}
  #allocation0 [shape = 'u32[]', space=smem, size = 0x4, offset = 0x4, fixed_abs, tag = 'smem constant byte address 0x4 - core index']
  #allocation1 [shape = 'u32[144,128]{1,0:T(1,128)}', space=vmem, size = 0x12000, scoped, tag = 'internal scratch']
  %s0 = inlined_call_operand.vmem [shape: s32[1,128], index: 0, kind: input, shape index: {}]
  %s1 = inlined_call_operand.vmem [shape: f32[128,32], index: 1, kind: input, shape index: {}]
  %s2 = inlined_call_operand.vmem [shape: f32[1,32], index: 2, kind: input, shape index: {}]
  %s3 = inlined_call_operand.vmem [shape: f32[1,32], index: 3, kind: input, shape index: {}]
  %s4 = inlined_call_operand.vmem [shape: f32[32,16], index: 4, kind: input, shape index: {}]
  %s5 = inlined_call_operand.vmem [shape: f32[1,16], index: 5, kind: input, shape index: {}]
  %s6 = inlined_call_operand.vmem [shape: f32[32,16], index: 6, kind: input, shape index: {}]
  %s7 = inlined_call_operand.vmem [shape: f32[1,16], index: 7, kind: input, shape index: {}]
  %s8 = inlined_call_operand.vmem [shape: f32[128,16], index: 8, kind: output, shape index: {0}]
  %s9 = inlined_call_operand.hbm [shape: f32[1,8,16], index: 9, kind: output, shape index: {1}]
  %10 = xla_tuple %s8, %s9
  %s11 = sld [smem:[#allocation0]]
  $region50: #{tpu_custom_call.1} parent=0
    _
  %s13 = ssub.s32 1, %s11
  %s14 = scalar_select 0, %s13, %s11
  $region1: #{tpu_custom_call.1} parent=0
    #allocation2 [shape = 'u8[4096]{0}', space=vmem, size = 0x1000, scoped, tag = 'output window, operand 1, single buffered']
    #allocation3 [shape = 's32[1]{0}', space=sflag, size = 0x4, scoped, tag = 'scoped memory for tpu_custom_call.1']
    %15 = vsyncpa [#allocation3], 0
    // Predicated region
    $region2: #{tpu_custom_call.1} parent=1 // pred_check
      _
    $region3: #{tpu_custom_call.1} parent=1 // pred_check_branch
      %17 = sbr.rel (0) target = $region5
    $region4: #{tpu_custom_call.1} parent=1 // pred_region
      _
    $region5: #{tpu_custom_call.1} parent=1 // pred_fallthru
      _
    // Predicated region
    $region6: #{tpu_custom_call.1} parent=1 // pred_check
      _
    $region7: #{tpu_custom_call.1} parent=1 // pred_check_branch
      %19 = sbr.rel (0) target = $region9
    $region8: #{tpu_custom_call.1} parent=1 // pred_region
      _
    $region9: #{tpu_custom_call.1} parent=1 // pred_fallthru
      _
    // Predicated region
    $region10: #{tpu_custom_call.1} parent=1 // pred_check
      _
    $region11: #{tpu_custom_call.1} parent=1 // pred_check_branch
      %21 = sbr.rel (0) target = $region13
    $region12: #{tpu_custom_call.1} parent=1 // pred_region
      _
    $region13: #{tpu_custom_call.1} parent=1 // pred_fallthru
      _
    // Predicated region
    $region14: #{tpu_custom_call.1} parent=1 // pred_check
      _
    $region15: #{tpu_custom_call.1} parent=1 // pred_check_branch
      %23 = sbr.rel (0) target = $region17
    $region16: #{tpu_custom_call.1} parent=1 // pred_region
      _
    $region17: #{tpu_custom_call.1} parent=1 // pred_fallthru
      _
    // Predicated region
    $region18: #{tpu_custom_call.1} parent=1 // pred_check
      _
    $region19: #{tpu_custom_call.1} parent=1 // pred_check_branch
      %25 = sbr.rel (0) target = $region21
    $region20: #{tpu_custom_call.1} parent=1 // pred_region
      _
    $region21: #{tpu_custom_call.1} parent=1 // pred_fallthru
      _
    // Predicated region
    $region22: #{tpu_custom_call.1} parent=1 // pred_check
      _
    $region23: #{tpu_custom_call.1} parent=1 // pred_check_branch
      %27 = sbr.rel (0) target = $region25
    $region24: #{tpu_custom_call.1} parent=1 // pred_region
      _
    $region25: #{tpu_custom_call.1} parent=1 // pred_fallthru
      _
    // Predicated region
    $region26: #{tpu_custom_call.1} parent=1 // pred_check
      _
    $region27: #{tpu_custom_call.1} parent=1 // pred_check_branch
      %29 = sbr.rel (0) target = $region29
    $region28: #{tpu_custom_call.1} parent=1 // pred_region
      _
    $region29: #{tpu_custom_call.1} parent=1 // pred_fallthru
      _
    // Predicated region
    $region30: #{tpu_custom_call.1} parent=1 // pred_check
      _
    $region31: #{tpu_custom_call.1} parent=1 // pred_check_branch
      %31 = sbr.rel (0) target = $region33
    $region32: #{tpu_custom_call.1} parent=1 // pred_region
      _
    $region33: #{tpu_custom_call.1} parent=1 // pred_fallthru
      _
    %v32 = vld [vmem:[%s1] sm:$0xff]
    %v33 = vld [vmem:[%s1 + $0x8] sm:$0xff]
    %v34 = vld [vmem:[%s1 + $0x10] sm:$0xff]
    %v35 = vld [vmem:[%s1 + $0x18] sm:$0xff]
    %v36 = vld [vmem:[%s1 + $0x20] sm:$0xff]
    %v37 = vld [vmem:[%s1 + $0x28] sm:$0xff]
    %v38 = vld [vmem:[%s1 + $0x30] sm:$0xff]
    %v39 = vld [vmem:[%s1 + $0x38] sm:$0xff]
    %v40 = vld [vmem:[%s1 + $0x40] sm:$0xff]
    %v41 = vld [vmem:[%s1 + $0x48] sm:$0xff]
    %v42 = vld [vmem:[%s1 + $0x50] sm:$0xff]
    %v43 = vld [vmem:[%s1 + $0x58] sm:$0xff]
    %v44 = vld [vmem:[%s1 + $0x60] sm:$0xff]
    %v45 = vld [vmem:[%s1 + $0x68] sm:$0xff]
    %v46 = vld [vmem:[%s1 + $0x70] sm:$0xff]
    %v47 = vld [vmem:[%s1 + $0x78] sm:$0xff]
    %vm48 = vcmask 261120
    %v49 = vsel %vm48, %v32, 0.0
    %50 = vadd.xlane.f32.xlu0 %v49
    %v51 = vpop.xlane.xlu0 %50
    %v52 = vsel %vm48, %v33, 0.0
    %53 = vadd.xlane.f32.xlu0 %v52
    %v54 = vpop.xlane.xlu0 %53
    %v55 = vsel %vm48, %v34, 0.0
    %56 = vadd.xlane.f32.xlu0 %v55
    %v57 = vpop.xlane.xlu0 %56
    %v58 = vsel %vm48, %v35, 0.0
    %59 = vadd.xlane.f32.xlu0 %v58
    %v60 = vpop.xlane.xlu0 %59
    %v61 = vsel %vm48, %v36, 0.0
    %62 = vadd.xlane.f32.xlu0 %v61
    %v63 = vpop.xlane.xlu0 %62
    %v64 = vsel %vm48, %v37, 0.0
    %65 = vadd.xlane.f32.xlu0 %v64
    %v66 = vpop.xlane.xlu0 %65
    %v67 = vsel %vm48, %v38, 0.0
    %68 = vadd.xlane.f32.xlu0 %v67
    %v69 = vpop.xlane.xlu0 %68
    %v70 = vsel %vm48, %v39, 0.0
    %71 = vadd.xlane.f32.xlu0 %v70
    %v72 = vpop.xlane.xlu0 %71
    %v73 = vsel %vm48, %v40, 0.0
    %74 = vadd.xlane.f32.xlu0 %v73
    %v75 = vpop.xlane.xlu0 %74
    %v76 = vsel %vm48, %v41, 0.0
    %77 = vadd.xlane.f32.xlu0 %v76
    %v78 = vpop.xlane.xlu0 %77
    %v79 = vsel %vm48, %v42, 0.0
    %80 = vadd.xlane.f32.xlu0 %v79
    %v81 = vpop.xlane.xlu0 %80
    %v82 = vsel %vm48, %v43, 0.0
    %83 = vadd.xlane.f32.xlu0 %v82
    %v84 = vpop.xlane.xlu0 %83
    %v85 = vsel %vm48, %v44, 0.0
    %86 = vadd.xlane.f32.xlu0 %v85
    %v87 = vpop.xlane.xlu0 %86
    %v88 = vsel %vm48, %v45, 0.0
    %89 = vadd.xlane.f32.xlu0 %v88
    %v90 = vpop.xlane.xlu0 %89
    %v91 = vsel %vm48, %v46, 0.0
    %92 = vadd.xlane.f32.xlu0 %v91
    %v93 = vpop.xlane.xlu0 %92
    %v94 = vsel %vm48, %v47, 0.0
    %95 = vadd.xlane.f32.xlu0 %v94
    %v96 = vpop.xlane.xlu0 %95
    %v97 = vrcp.pop 32.0
    %v98 = vmul.f32 %v51, %v97
    %v99 = vmul.f32 %v54, %v97
    %v100 = vmul.f32 %v57, %v97
    %v101 = vmul.f32 %v60, %v97
    %v102 = vmul.f32 %v63, %v97
    %v103 = vmul.f32 %v66, %v97
    %v104 = vmul.f32 %v69, %v97
    %v105 = vmul.f32 %v72, %v97
    %v106 = vmul.f32 %v75, %v97
    %v107 = vmul.f32 %v78, %v97
    %v108 = vmul.f32 %v81, %v97
    %v109 = vmul.f32 %v84, %v97
    %v110 = vmul.f32 %v87, %v97
    %v111 = vmul.f32 %v90, %v97
    %v112 = vmul.f32 %v93, %v97
    %v113 = vmul.f32 %v96, %v97
    %v114 = vmul.f32 %v32, %v32
    %v115 = vmul.f32 %v33, %v33
    %v116 = vmul.f32 %v34, %v34
    %v117 = vmul.f32 %v35, %v35
    %v118 = vmul.f32 %v36, %v36
    %v119 = vmul.f32 %v37, %v37
    %v120 = vmul.f32 %v38, %v38
    %v121 = vmul.f32 %v39, %v39
    %v122 = vmul.f32 %v40, %v40
    %v123 = vmul.f32 %v41, %v41
    %v124 = vmul.f32 %v42, %v42
    %v125 = vmul.f32 %v43, %v43
    %v126 = vmul.f32 %v44, %v44
    %v127 = vmul.f32 %v45, %v45
    %v128 = vmul.f32 %v46, %v46
    %v129 = vmul.f32 %v47, %v47
    %v130 = vsel %vm48, %v114, 0.0
    %131 = vadd.xlane.f32.xlu0 %v130
    %v132 = vpop.xlane.xlu0 %131
    %v133 = vsel %vm48, %v115, 0.0
    %134 = vadd.xlane.f32.xlu0 %v133
    %v135 = vpop.xlane.xlu0 %134
    %v136 = vsel %vm48, %v116, 0.0
    %137 = vadd.xlane.f32.xlu0 %v136
    %v138 = vpop.xlane.xlu0 %137
    %v139 = vsel %vm48, %v117, 0.0
    %140 = vadd.xlane.f32.xlu0 %v139
    %v141 = vpop.xlane.xlu0 %140
    %v142 = vsel %vm48, %v118, 0.0
    %143 = vadd.xlane.f32.xlu0 %v142
    %v144 = vpop.xlane.xlu0 %143
    %v145 = vsel %vm48, %v119, 0.0
    %146 = vadd.xlane.f32.xlu0 %v145
    %v147 = vpop.xlane.xlu0 %146
    %v148 = vsel %vm48, %v120, 0.0
    %149 = vadd.xlane.f32.xlu0 %v148
    %v150 = vpop.xlane.xlu0 %149
    %v151 = vsel %vm48, %v121, 0.0
    %152 = vadd.xlane.f32.xlu0 %v151
    %v153 = vpop.xlane.xlu0 %152
    %v154 = vsel %vm48, %v122, 0.0
    %155 = vadd.xlane.f32.xlu0 %v154
    %v156 = vpop.xlane.xlu0 %155
    %v157 = vsel %vm48, %v123, 0.0
    %158 = vadd.xlane.f32.xlu0 %v157
    %v159 = vpop.xlane.xlu0 %158
    %v160 = vsel %vm48, %v124, 0.0
    %161 = vadd.xlane.f32.xlu0 %v160
    %v162 = vpop.xlane.xlu0 %161
    %v163 = vsel %vm48, %v125, 0.0
    %164 = vadd.xlane.f32.xlu0 %v163
    %v165 = vpop.xlane.xlu0 %164
    %v166 = vsel %vm48, %v126, 0.0
    %167 = vadd.xlane.f32.xlu0 %v166
    %v168 = vpop.xlane.xlu0 %167
    %v169 = vsel %vm48, %v127, 0.0
    %170 = vadd.xlane.f32.xlu0 %v169
    %v171 = vpop.xlane.xlu0 %170
    %v172 = vsel %vm48, %v128, 0.0
    %173 = vadd.xlane.f32.xlu0 %v172
    %v174 = vpop.xlane.xlu0 %173
    %v175 = vsel %vm48, %v129, 0.0
    %176 = vadd.xlane.f32.xlu0 %v175
    %v177 = vpop.xlane.xlu0 %176
    %v178 = vmul.f32 %v132, %v97
    %v179 = vmul.f32 %v135, %v97
    %v180 = vmul.f32 %v138, %v97
    %v181 = vmul.f32 %v141, %v97
    %v182 = vmul.f32 %v144, %v97
    %v183 = vmul.f32 %v147, %v97
    %v184 = vmul.f32 %v150, %v97
    %v185 = vmul.f32 %v153, %v97
    %v186 = vmul.f32 %v156, %v97
    %v187 = vmul.f32 %v159, %v97
    %v188 = vmul.f32 %v162, %v97
    %v189 = vmul.f32 %v165, %v97
    %v190 = vmul.f32 %v168, %v97
    %v191 = vmul.f32 %v171, %v97
    %v192 = vmul.f32 %v174, %v97
    %v193 = vmul.f32 %v177, %v97
    %v194 = vmul.f32 %v98, %v98
    %v195 = vmul.f32 %v99, %v99
    %v196 = vmul.f32 %v100, %v100
    %v197 = vmul.f32 %v101, %v101
    %v198 = vmul.f32 %v102, %v102
    %v199 = vmul.f32 %v103, %v103
    %v200 = vmul.f32 %v104, %v104
    %v201 = vmul.f32 %v105, %v105
    %v202 = vmul.f32 %v106, %v106
    %v203 = vmul.f32 %v107, %v107
    %v204 = vmul.f32 %v108, %v108
    %v205 = vmul.f32 %v109, %v109
    %v206 = vmul.f32 %v110, %v110
    %v207 = vmul.f32 %v111, %v111
    %v208 = vmul.f32 %v112, %v112
    %v209 = vmul.f32 %v113, %v113
    %v210 = vsub.f32 %v178, %v194
    %v211 = vsub.f32 %v179, %v195
    %v212 = vsub.f32 %v180, %v196
    %v213 = vsub.f32 %v181, %v197
    %v214 = vsub.f32 %v182, %v198
    %v215 = vsub.f32 %v183, %v199
    %v216 = vsub.f32 %v184, %v200
    %v217 = vsub.f32 %v185, %v201
    %v218 = vsub.f32 %v186, %v202
    %v219 = vsub.f32 %v187, %v203
    %v220 = vsub.f32 %v188, %v204
    %v221 = vsub.f32 %v189, %v205
    %v222 = vsub.f32 %v190, %v206
    %v223 = vsub.f32 %v191, %v207
    %v224 = vsub.f32 %v192, %v208
    %v225 = vsub.f32 %v193, %v209
    %v226 = vmax.f32 %v210, 0.0
    %v227 = vmax.f32 %v211, 0.0
    %v228 = vmax.f32 %v212, 0.0
    %v229 = vmax.f32 %v213, 0.0
    %v230 = vmax.f32 %v214, 0.0
    %v231 = vmax.f32 %v215, 0.0
    %v232 = vmax.f32 %v216, 0.0
    %v233 = vmax.f32 %v217, 0.0
    %v234 = vmax.f32 %v218, 0.0
    %v235 = vmax.f32 %v219, 0.0
    %v236 = vmax.f32 %v220, 0.0
    %v237 = vmax.f32 %v221, 0.0
    %v238 = vmax.f32 %v222, 0.0
    %v239 = vmax.f32 %v223, 0.0
    %v240 = vmax.f32 %v224, 0.0
    %v241 = vmax.f32 %v225, 0.0
    %v242 = vsub.f32 %v32, %v98
    %v243 = vsub.f32 %v33, %v99
    %v244 = vsub.f32 %v34, %v100
    %v245 = vsub.f32 %v35, %v101
    %v246 = vsub.f32 %v36, %v102
    %v247 = vsub.f32 %v37, %v103
    %v248 = vsub.f32 %v38, %v104
    %v249 = vsub.f32 %v39, %v105
    %v250 = vsub.f32 %v40, %v106
    %v251 = vsub.f32 %v41, %v107
    %v252 = vsub.f32 %v42, %v108
    %v253 = vsub.f32 %v43, %v109
    %v254 = vsub.f32 %v44, %v110
    %v255 = vsub.f32 %v45, %v111
    %v256 = vsub.f32 %v46, %v112
    %v257 = vsub.f32 %v47, %v113
    %v258 = vadd.f32 %v226, 1e-05
    %v259 = vadd.f32 %v227, 1e-05
    %v260 = vadd.f32 %v228, 1e-05
    %v261 = vadd.f32 %v229, 1e-05
    %v262 = vadd.f32 %v230, 1e-05
    %v263 = vadd.f32 %v231, 1e-05
    %v264 = vadd.f32 %v232, 1e-05
    %v265 = vadd.f32 %v233, 1e-05
    %v266 = vadd.f32 %v234, 1e-05
    %v267 = vadd.f32 %v235, 1e-05
    %v268 = vadd.f32 %v236, 1e-05
    %v269 = vadd.f32 %v237, 1e-05
    %v270 = vadd.f32 %v238, 1e-05
    %v271 = vadd.f32 %v239, 1e-05
    %v272 = vadd.f32 %v240, 1e-05
    %v273 = vadd.f32 %v241, 1e-05
    %v274 = vrsqrt.pop %v258
    %v275 = vrsqrt.pop %v259
    %v276 = vrsqrt.pop %v260
    %v277 = vrsqrt.pop %v261
    %v278 = vrsqrt.pop %v262
    %v279 = vrsqrt.pop %v263
    %v280 = vrsqrt.pop %v264
    %v281 = vrsqrt.pop %v265
    %v282 = vrsqrt.pop %v266
    %v283 = vrsqrt.pop %v267
    %v284 = vrsqrt.pop %v268
    %v285 = vrsqrt.pop %v269
    %v286 = vrsqrt.pop %v270
    %v287 = vrsqrt.pop %v271
    %v288 = vrsqrt.pop %v272
    %v289 = vrsqrt.pop %v273
    %v290 = vmul.f32 %v242, %v274
    %v291 = vmul.f32 %v243, %v275
    %v292 = vmul.f32 %v244, %v276
    %v293 = vmul.f32 %v245, %v277
    %v294 = vmul.f32 %v246, %v278
    %v295 = vmul.f32 %v247, %v279
    %v296 = vmul.f32 %v248, %v280
    %v297 = vmul.f32 %v249, %v281
    %v298 = vmul.f32 %v250, %v282
    %v299 = vmul.f32 %v251, %v283
    %v300 = vmul.f32 %v252, %v284
    %v301 = vmul.f32 %v253, %v285
    %v302 = vmul.f32 %v254, %v286
    %v303 = vmul.f32 %v255, %v287
    %v304 = vmul.f32 %v256, %v288
    %v305 = vmul.f32 %v257, %v289
    %v306 = vld [vmem:[%s2] sm:$0x1]
    %v308 = vlaneseq
    %v309 = vshrl.u32 %v308, 7
    %v310 = vsub.s32 0, %v309
    %v311 = vrot.slane %v306, %v310
    %v313 = vmul.f32 %v290, %v311
    %v314 = vmul.f32 %v291, %v311
    %v315 = vmul.f32 %v292, %v311
    %v316 = vmul.f32 %v293, %v311
    %v317 = vmul.f32 %v294, %v311
    %v318 = vmul.f32 %v295, %v311
    %v319 = vmul.f32 %v296, %v311
    %v320 = vmul.f32 %v297, %v311
    %v321 = vmul.f32 %v298, %v311
    %v322 = vmul.f32 %v299, %v311
    %v323 = vmul.f32 %v300, %v311
    %v324 = vmul.f32 %v301, %v311
    %v325 = vmul.f32 %v302, %v311
    %v326 = vmul.f32 %v303, %v311
    %v327 = vmul.f32 %v304, %v311
    %v328 = vmul.f32 %v305, %v311
    %v329 = vld [vmem:[%s3] sm:$0x1]
    %v331 = vlaneseq
    %v332 = vshrl.u32 %v331, 7
    %v333 = vsub.s32 0, %v332
    %v334 = vrot.slane %v329, %v333
    %v336 = vadd.f32 %v313, %v334
    %v337 = vadd.f32 %v314, %v334
    %v338 = vadd.f32 %v315, %v334
    %v339 = vadd.f32 %v316, %v334
    %v340 = vadd.f32 %v317, %v334
    %v341 = vadd.f32 %v318, %v334
    %v342 = vadd.f32 %v319, %v334
    %v343 = vadd.f32 %v320, %v334
    %v344 = vadd.f32 %v321, %v334
    %v345 = vadd.f32 %v322, %v334
    %v346 = vadd.f32 %v323, %v334
    %v347 = vadd.f32 %v324, %v334
    %v348 = vadd.f32 %v325, %v334
    %v349 = vadd.f32 %v326, %v334
    %v350 = vadd.f32 %v327, %v334
    %v351 = vadd.f32 %v328, %v334
    %v352 = vld [vmem:[%s4] sm:$0xff]
    %v353 = vld [vmem:[%s4 + $0x8] sm:$0xff]
    %v354 = vld [vmem:[%s4 + $0x10] sm:$0xff]
    %v355 = vld [vmem:[%s4 + $0x18] sm:$0xff]
    %v356 = vld [vmem:[%s5] sm:$0x1]
    %v358 = vlaneseq
    %v359 = vshrl.u32 %v358, 7
    %v360 = vsub.s32 0, %v359
    %v361 = vrot.slane %v356, %v360
    %v364 = vsel %vm48, %v336, 0
    %v367 = vsel %vm48, %v337, 0
    %v370 = vsel %vm48, %v338, 0
    %v373 = vsel %vm48, %v339, 0
    %v376 = vsel %vm48, %v340, 0
    %v379 = vsel %vm48, %v341, 0
    %v382 = vsel %vm48, %v342, 0
    %v385 = vsel %vm48, %v343, 0
    %v388 = vsel %vm48, %v344, 0
    %v391 = vsel %vm48, %v345, 0
    %v394 = vsel %vm48, %v346, 0
    %v397 = vsel %vm48, %v347, 0
    %v400 = vsel %vm48, %v348, 0
    %v403 = vsel %vm48, %v349, 0
    %v406 = vsel %vm48, %v350, 0
    %v409 = vsel %vm48, %v351, 0
    %411 = vmatprep.subr.mxu0 0.0
    %412 = vmatpush1.msra.mxu0 %v352
    %413 = vmatprep.subr.mxu0 0.0
    %414 = vmatpush1.msra.mxu0 %v353
    %415 = vmatprep.subr.mxu0 0.0
    %416 = vmatpush1.msra.mxu0 %v354
    %417 = vmatprep.subr.mxu0 0.0
    %418 = vmatpush1.msra.mxu0 %v355
    %419 = vmatprep.subr.mxu0 0.0
    %420 = vmatpush1.msra.mxu0 0.0
    %421 = vmatprep.subr.mxu0 0.0
    %422 = vmatpush1.msra.mxu0 0.0
    %423 = vmatprep.subr.mxu0 0.0
    %424 = vmatpush1.msra.mxu0 0.0
    %425 = vmatprep.subr.mxu0 0.0
    %426 = vmatpush1.msra.mxu0 0.0
    %427 = vmatprep.subr.mxu0 0.0
    %428 = vmatpush1.msra.mxu0 0.0
    %429 = vmatprep.subr.mxu0 0.0
    %430 = vmatpush1.msra.mxu0 0.0
    %431 = vmatprep.subr.mxu0 0.0
    %432 = vmatpush1.msra.mxu0 0.0
    %433 = vmatprep.subr.mxu0 0.0
    %434 = vmatpush1.msra.mxu0 0.0
    %435 = vmatprep.subr.mxu0 0.0
    %436 = vmatpush1.msra.mxu0 0.0
    %437 = vmatprep.subr.mxu0 0.0
    %438 = vmatpush1.msra.mxu0 0.0
    %439 = vmatprep.subr.mxu0 0.0
    %440 = vmatpush1.msra.mxu0 0.0
    %441 = vmatprep.subr.mxu0 0.0
    %442 = vmatpush1.msra.mxu0 0.0
    %443 = vmatprep.subr.mxu0 0.0
    %444 = vmatpush1.msra.mxu0 0.0
    %445 = vmatprep.subr.mxu0 0.0
    %446 = vmatpush1.msra.mxu0 0.0
    %447 = vmatprep.subr.mxu0 0.0
    %448 = vmatpush1.msra.mxu0 0.0
    %449 = vmatprep.subr.mxu0 0.0
    %450 = vmatpush1.msra.mxu0 0.0
    %451 = vmatprep.subr.mxu0 0.0
    %452 = vmatpush1.msra.mxu0 0.0
    %453 = vmatprep.subr.mxu0 0.0
    %454 = vmatpush1.msra.mxu0 0.0
    %455 = vmatprep.subr.mxu0 0.0
    %456 = vmatpush1.msra.mxu0 0.0
    %457 = vmatprep.subr.mxu0 0.0
    %458 = vmatpush1.msra.mxu0 0.0
    %459 = vmatprep.subr.mxu0 0.0
    %460 = vmatpush1.msra.mxu0 0.0
    %461 = vmatprep.subr.mxu0 0.0
    %462 = vmatpush1.msra.mxu0 0.0
    %463 = vmatprep.subr.mxu0 0.0
    %464 = vmatpush1.msra.mxu0 0.0
    %465 = vmatprep.subr.mxu0 0.0
    %466 = vmatpush1.msra.mxu0 0.0
    %467 = vmatprep.subr.mxu0 0.0
    %468 = vmatpush1.msra.mxu0 0.0
    %469 = vmatprep.subr.mxu0 0.0
    %470 = vmatpush1.msra.mxu0 0.0
    %471 = vmatprep.subr.mxu0 0.0
    %472 = vmatpush1.msra.mxu0 0.0
    %473 = vmatprep.subr.mxu0 0.0
    %474 = vmatpush1.msra.mxu0 0.0
    %475 = vmatprep.mubr.f32.mxu0 0.0
    %476 = vmatmul.mubr.f32.gmra.mrb[0].mxu0 %v364
    %v477 = vpop.f32.mrb[0].mxu0
    %v478 = vadd.f32 %v361, %v477
    %v479 = vpop.f32.mrb[0].mxu0
    %480 = vmatprep.mubr.f32.mxu0 0.0
    %481 = vmatmul.mubr.f32.gmra.mrb[0].mxu0 %v367
    %v482 = vpop.f32.mrb[0].mxu0
    %v483 = vadd.f32 %v361, %v482
    %v484 = vpop.f32.mrb[0].mxu0
    %485 = vmatprep.mubr.f32.mxu0 0.0
    %486 = vmatmul.mubr.f32.gmra.mrb[0].mxu0 %v370
    %v487 = vpop.f32.mrb[0].mxu0
    %v488 = vadd.f32 %v361, %v487
    %v489 = vpop.f32.mrb[0].mxu0
    %490 = vmatprep.mubr.f32.mxu0 0.0
    %491 = vmatmul.mubr.f32.gmra.mrb[0].mxu0 %v373
    %v492 = vpop.f32.mrb[0].mxu0
    %v493 = vadd.f32 %v361, %v492
    %v494 = vpop.f32.mrb[0].mxu0
    %495 = vmatprep.mubr.f32.mxu0 0.0
    %496 = vmatmul.mubr.f32.gmra.mrb[0].mxu0 %v376
    %v497 = vpop.f32.mrb[0].mxu0
    %v498 = vadd.f32 %v361, %v497
    %v499 = vpop.f32.mrb[0].mxu0
    %500 = vmatprep.mubr.f32.mxu0 0.0
    %501 = vmatmul.mubr.f32.gmra.mrb[0].mxu0 %v379
    %v502 = vpop.f32.mrb[0].mxu0
    %v503 = vadd.f32 %v361, %v502
    %v504 = vpop.f32.mrb[0].mxu0
    %505 = vmatprep.mubr.f32.mxu0 0.0
    %506 = vmatmul.mubr.f32.gmra.mrb[0].mxu0 %v382
    %v507 = vpop.f32.mrb[0].mxu0
    %v508 = vadd.f32 %v361, %v507
    %v509 = vpop.f32.mrb[0].mxu0
    %510 = vmatprep.mubr.f32.mxu0 0.0
    %511 = vmatmul.mubr.f32.gmra.mrb[0].mxu0 %v385
    %v512 = vpop.f32.mrb[0].mxu0
    %v513 = vadd.f32 %v361, %v512
    %v514 = vpop.f32.mrb[0].mxu0
    %515 = vmatprep.mubr.f32.mxu0 0.0
    %516 = vmatmul.mubr.f32.gmra.mrb[0].mxu0 %v388
    %v517 = vpop.f32.mrb[0].mxu0
    %v518 = vadd.f32 %v361, %v517
    %v519 = vpop.f32.mrb[0].mxu0
    %520 = vmatprep.mubr.f32.mxu0 0.0
    %521 = vmatmul.mubr.f32.gmra.mrb[0].mxu0 %v391
    %v522 = vpop.f32.mrb[0].mxu0
    %v523 = vadd.f32 %v361, %v522
    %v524 = vpop.f32.mrb[0].mxu0
    %525 = vmatprep.mubr.f32.mxu0 0.0
    %526 = vmatmul.mubr.f32.gmra.mrb[0].mxu0 %v394
    %v527 = vpop.f32.mrb[0].mxu0
    %v528 = vadd.f32 %v361, %v527
    %v529 = vpop.f32.mrb[0].mxu0
    %530 = vmatprep.mubr.f32.mxu0 0.0
    %531 = vmatmul.mubr.f32.gmra.mrb[0].mxu0 %v397
    %v532 = vpop.f32.mrb[0].mxu0
    %v533 = vadd.f32 %v361, %v532
    %v534 = vpop.f32.mrb[0].mxu0
    %535 = vmatprep.mubr.f32.mxu0 0.0
    %536 = vmatmul.mubr.f32.gmra.mrb[0].mxu0 %v400
    %v537 = vpop.f32.mrb[0].mxu0
    %v538 = vadd.f32 %v361, %v537
    %v539 = vpop.f32.mrb[0].mxu0
    %540 = vmatprep.mubr.f32.mxu0 0.0
    %541 = vmatmul.mubr.f32.gmra.mrb[0].mxu0 %v403
    %v542 = vpop.f32.mrb[0].mxu0
    %v543 = vadd.f32 %v361, %v542
    %v544 = vpop.f32.mrb[0].mxu0
    %545 = vmatprep.mubr.f32.mxu0 0.0
    %546 = vmatmul.mubr.f32.gmra.mrb[0].mxu0 %v406
    %v547 = vpop.f32.mrb[0].mxu0
    %v548 = vadd.f32 %v361, %v547
    %v549 = vpop.f32.mrb[0].mxu0
    %550 = vmatprep.mubr.f32.mxu0 0.0
    %551 = vmatmul.mubr.f32.gmra.mrb[0].mxu0 %v409
    %v552 = vpop.f32.mrb[0].mxu0
    %v553 = vadd.f32 %v361, %v552
    %v554 = vpop.f32.mrb[0].mxu0
    %555 = vdwg.mxu0
    %v556 = vmul.f32 %v478, 0.5
    %v557 = vmul.f32 %v483, 0.5
    %v558 = vmul.f32 %v488, 0.5
    %v559 = vmul.f32 %v493, 0.5
    %v560 = vmul.f32 %v498, 0.5
    %v561 = vmul.f32 %v503, 0.5
    %v562 = vmul.f32 %v508, 0.5
    %v563 = vmul.f32 %v513, 0.5
    %v564 = vmul.f32 %v518, 0.5
    %v565 = vmul.f32 %v523, 0.5
    %v566 = vmul.f32 %v528, 0.5
    %v567 = vmul.f32 %v533, 0.5
    %v568 = vmul.f32 %v538, 0.5
    %v569 = vmul.f32 %v543, 0.5
    %v570 = vmul.f32 %v548, 0.5
    %v571 = vmul.f32 %v553, 0.5
    %v572 = vmul.f32 %v478, 0.70710677
    %v573 = vmul.f32 %v483, 0.70710677
    %v574 = vmul.f32 %v488, 0.70710677
    %v575 = vmul.f32 %v493, 0.70710677
    %v576 = vmul.f32 %v498, 0.70710677
    %v577 = vmul.f32 %v503, 0.70710677
    %v578 = vmul.f32 %v508, 0.70710677
    %v579 = vmul.f32 %v513, 0.70710677
    %v580 = vmul.f32 %v518, 0.70710677
    %v581 = vmul.f32 %v523, 0.70710677
    %v582 = vmul.f32 %v528, 0.70710677
    %v583 = vmul.f32 %v533, 0.70710677
    %v584 = vmul.f32 %v538, 0.70710677
    %v585 = vmul.f32 %v543, 0.70710677
    %v586 = vmul.f32 %v548, 0.70710677
    %v587 = vmul.f32 %v553, 0.70710677
    %vm588 = vcmp.lt.f32.partialorder %v572, 0.0
    %vm589 = vcmp.lt.f32.partialorder %v573, 0.0
    %vm590 = vcmp.lt.f32.partialorder %v574, 0.0
    %vm591 = vcmp.lt.f32.partialorder %v575, 0.0
    %vm592 = vcmp.lt.f32.partialorder %v576, 0.0
    %vm593 = vcmp.lt.f32.partialorder %v577, 0.0
    %vm594 = vcmp.lt.f32.partialorder %v578, 0.0
    %vm595 = vcmp.lt.f32.partialorder %v579, 0.0
    %vm596 = vcmp.lt.f32.partialorder %v580, 0.0
    %vm597 = vcmp.lt.f32.partialorder %v581, 0.0
    %vm598 = vcmp.lt.f32.partialorder %v582, 0.0
    %vm599 = vcmp.lt.f32.partialorder %v583, 0.0
    %vm600 = vcmp.lt.f32.partialorder %v584, 0.0
    %vm601 = vcmp.lt.f32.partialorder %v585, 0.0
    %vm602 = vcmp.lt.f32.partialorder %v586, 0.0
    %vm603 = vcmp.lt.f32.partialorder %v587, 0.0
    %v604 = vsel %vm588, -1.0, 1.0
    %v605 = vsel %vm589, -1.0, 1.0
    %v606 = vsel %vm590, -1.0, 1.0
    %v607 = vsel %vm591, -1.0, 1.0
    %v608 = vsel %vm592, -1.0, 1.0
    %v609 = vsel %vm593, -1.0, 1.0
    %v610 = vsel %vm594, -1.0, 1.0
    %v611 = vsel %vm595, -1.0, 1.0
    %v612 = vsel %vm596, -1.0, 1.0
    %v613 = vsel %vm597, -1.0, 1.0
    %v614 = vsel %vm598, -1.0, 1.0
    %v615 = vsel %vm599, -1.0, 1.0
    %v616 = vsel %vm600, -1.0, 1.0
    %v617 = vsel %vm601, -1.0, 1.0
    %v618 = vsel %vm602, -1.0, 1.0
    %v619 = vsel %vm603, -1.0, 1.0
    %v620 = vand.u32 2147483647, %v572
    %v621 = vand.u32 2147483647, %v573
    %v622 = vand.u32 2147483647, %v574
    %v623 = vand.u32 2147483647, %v575
    %v624 = vand.u32 2147483647, %v576
    %v625 = vand.u32 2147483647, %v577
    %v626 = vand.u32 2147483647, %v578
    %v627 = vand.u32 2147483647, %v579
    %v628 = vand.u32 2147483647, %v580
    %v629 = vand.u32 2147483647, %v581
    %v630 = vand.u32 2147483647, %v582
    %v631 = vand.u32 2147483647, %v583
    %v632 = vand.u32 2147483647, %v584
    %v633 = vand.u32 2147483647, %v585
    %v634 = vand.u32 2147483647, %v586
    %v635 = vand.u32 2147483647, %v587
    %v636 = vmul.f32 %v620, 0.3275911
    %v637 = vmul.f32 %v621, 0.3275911
    %v638 = vmul.f32 %v622, 0.3275911
    %v639 = vmul.f32 %v623, 0.3275911
    %v640 = vmul.f32 %v624, 0.3275911
    %v641 = vmul.f32 %v625, 0.3275911
    %v642 = vmul.f32 %v626, 0.3275911
    %v643 = vmul.f32 %v627, 0.3275911
    %v644 = vmul.f32 %v628, 0.3275911
    %v645 = vmul.f32 %v629, 0.3275911
    %v646 = vmul.f32 %v630, 0.3275911
    %v647 = vmul.f32 %v631, 0.3275911
    %v648 = vmul.f32 %v632, 0.3275911
    %v649 = vmul.f32 %v633, 0.3275911
    %v650 = vmul.f32 %v634, 0.3275911
    %v651 = vmul.f32 %v635, 0.3275911
    %v652 = vadd.f32 %v636, 1.0
    %v653 = vadd.f32 %v637, 1.0
    %v654 = vadd.f32 %v638, 1.0
    %v655 = vadd.f32 %v639, 1.0
    %v656 = vadd.f32 %v640, 1.0
    %v657 = vadd.f32 %v641, 1.0
    %v658 = vadd.f32 %v642, 1.0
    %v659 = vadd.f32 %v643, 1.0
    %v660 = vadd.f32 %v644, 1.0
    %v661 = vadd.f32 %v645, 1.0
    %v662 = vadd.f32 %v646, 1.0
    %v663 = vadd.f32 %v647, 1.0
    %v664 = vadd.f32 %v648, 1.0
    %v665 = vadd.f32 %v649, 1.0
    %v666 = vadd.f32 %v650, 1.0
    %v667 = vadd.f32 %v651, 1.0
    %v668 = vrcp.pop %v652
    %v669 = vmul.f32 1.0, %v668
    %v670 = vrcp.pop %v653
    %v671 = vmul.f32 1.0, %v670
    %v672 = vrcp.pop %v654
    %v673 = vmul.f32 1.0, %v672
    %v674 = vrcp.pop %v655
    %v675 = vmul.f32 1.0, %v674
    %v676 = vrcp.pop %v656
    %v677 = vmul.f32 1.0, %v676
    %v678 = vrcp.pop %v657
    %v679 = vmul.f32 1.0, %v678
    %v680 = vrcp.pop %v658
    %v681 = vmul.f32 1.0, %v680
    %v682 = vrcp.pop %v659
    %v683 = vmul.f32 1.0, %v682
    %v684 = vrcp.pop %v660
    %v685 = vmul.f32 1.0, %v684
    %v686 = vrcp.pop %v661
    %v687 = vmul.f32 1.0, %v686
    %v688 = vrcp.pop %v662
    %v689 = vmul.f32 1.0, %v688
    %v690 = vrcp.pop %v663
    %v691 = vmul.f32 1.0, %v690
    %v692 = vrcp.pop %v664
    %v693 = vmul.f32 1.0, %v692
    %v694 = vrcp.pop %v665
    %v695 = vmul.f32 1.0, %v694
    %v696 = vrcp.pop %v666
    %v697 = vmul.f32 1.0, %v696
    %v698 = vrcp.pop %v667
    %v699 = vmul.f32 1.0, %v698
    %v700 = vmul.f32 %v669, 1.0614054
    %v701 = vmul.f32 %v671, 1.0614054
    %v702 = vmul.f32 %v673, 1.0614054
    %v703 = vmul.f32 %v675, 1.0614054
    %v704 = vmul.f32 %v677, 1.0614054
    %v705 = vmul.f32 %v679, 1.0614054
    %v706 = vmul.f32 %v681, 1.0614054
    %v707 = vmul.f32 %v683, 1.0614054
    %v708 = vmul.f32 %v685, 1.0614054
    %v709 = vmul.f32 %v687, 1.0614054
    %v710 = vmul.f32 %v689, 1.0614054
    %v711 = vmul.f32 %v691, 1.0614054
    %v712 = vmul.f32 %v693, 1.0614054
    %v713 = vmul.f32 %v695, 1.0614054
    %v714 = vmul.f32 %v697, 1.0614054
    %v715 = vmul.f32 %v699, 1.0614054
    %v716 = vadd.f32 %v700, -1.4531521
    %v717 = vadd.f32 %v701, -1.4531521
    %v718 = vadd.f32 %v702, -1.4531521
    %v719 = vadd.f32 %v703, -1.4531521
    %v720 = vadd.f32 %v704, -1.4531521
    %v721 = vadd.f32 %v705, -1.4531521
    %v722 = vadd.f32 %v706, -1.4531521
    %v723 = vadd.f32 %v707, -1.4531521
    %v724 = vadd.f32 %v708, -1.4531521
    %v725 = vadd.f32 %v709, -1.4531521
    %v726 = vadd.f32 %v710, -1.4531521
    %v727 = vadd.f32 %v711, -1.4531521
    %v728 = vadd.f32 %v712, -1.4531521
    %v729 = vadd.f32 %v713, -1.4531521
    %v730 = vadd.f32 %v714, -1.4531521
    %v731 = vadd.f32 %v715, -1.4531521
    %v732 = vmul.f32 %v716, %v669
    %v733 = vmul.f32 %v717, %v671
    %v734 = vmul.f32 %v718, %v673
    %v735 = vmul.f32 %v719, %v675
    %v736 = vmul.f32 %v720, %v677
    %v737 = vmul.f32 %v721, %v679
    %v738 = vmul.f32 %v722, %v681
    %v739 = vmul.f32 %v723, %v683
    %v740 = vmul.f32 %v724, %v685
    %v741 = vmul.f32 %v725, %v687
    %v742 = vmul.f32 %v726, %v689
    %v743 = vmul.f32 %v727, %v691
    %v744 = vmul.f32 %v728, %v693
    %v745 = vmul.f32 %v729, %v695
    %v746 = vmul.f32 %v730, %v697
    %v747 = vmul.f32 %v731, %v699
    %v748 = vadd.f32 %v732, 1.4214138
    %v749 = vadd.f32 %v733, 1.4214138
    %v750 = vadd.f32 %v734, 1.4214138
    %v751 = vadd.f32 %v735, 1.4214138
    %v752 = vadd.f32 %v736, 1.4214138
    %v753 = vadd.f32 %v737, 1.4214138
    %v754 = vadd.f32 %v738, 1.4214138
    %v755 = vadd.f32 %v739, 1.4214138
    %v756 = vadd.f32 %v740, 1.4214138
    %v757 = vadd.f32 %v741, 1.4214138
    %v758 = vadd.f32 %v742, 1.4214138
    %v759 = vadd.f32 %v743, 1.4214138
    %v760 = vadd.f32 %v744, 1.4214138
    %v761 = vadd.f32 %v745, 1.4214138
    %v762 = vadd.f32 %v746, 1.4214138
    %v763 = vadd.f32 %v747, 1.4214138
    %v764 = vmul.f32 %v748, %v669
    %v765 = vmul.f32 %v749, %v671
    %v766 = vmul.f32 %v750, %v673
    %v767 = vmul.f32 %v751, %v675
    %v768 = vmul.f32 %v752, %v677
    %v769 = vmul.f32 %v753, %v679
    %v770 = vmul.f32 %v754, %v681
    %v771 = vmul.f32 %v755, %v683
    %v772 = vmul.f32 %v756, %v685
    %v773 = vmul.f32 %v757, %v687
    %v774 = vmul.f32 %v758, %v689
    %v775 = vmul.f32 %v759, %v691
    %v776 = vmul.f32 %v760, %v693
    %v777 = vmul.f32 %v761, %v695
    %v778 = vmul.f32 %v762, %v697
    %v779 = vmul.f32 %v763, %v699
    %v780 = vadd.f32 %v764, -0.28449672
    %v781 = vadd.f32 %v765, -0.28449672
    %v782 = vadd.f32 %v766, -0.28449672
    %v783 = vadd.f32 %v767, -0.28449672
    %v784 = vadd.f32 %v768, -0.28449672
    %v785 = vadd.f32 %v769, -0.28449672
    %v786 = vadd.f32 %v770, -0.28449672
    %v787 = vadd.f32 %v771, -0.28449672
    %v788 = vadd.f32 %v772, -0.28449672
    %v789 = vadd.f32 %v773, -0.28449672
    %v790 = vadd.f32 %v774, -0.28449672
    %v791 = vadd.f32 %v775, -0.28449672
    %v792 = vadd.f32 %v776, -0.28449672
    %v793 = vadd.f32 %v777, -0.28449672
    %v794 = vadd.f32 %v778, -0.28449672
    %v795 = vadd.f32 %v779, -0.28449672
    %v796 = vmul.f32 %v780, %v669
    %v797 = vmul.f32 %v781, %v671
    %v798 = vmul.f32 %v782, %v673
    %v799 = vmul.f32 %v783, %v675
    %v800 = vmul.f32 %v784, %v677
    %v801 = vmul.f32 %v785, %v679
    %v802 = vmul.f32 %v786, %v681
    %v803 = vmul.f32 %v787, %v683
    %v804 = vmul.f32 %v788, %v685
    %v805 = vmul.f32 %v789, %v687
    %v806 = vmul.f32 %v790, %v689
    %v807 = vmul.f32 %v791, %v691
    %v808 = vmul.f32 %v792, %v693
    %v809 = vmul.f32 %v793, %v695
    %v810 = vmul.f32 %v794, %v697
    %v811 = vmul.f32 %v795, %v699
    %v812 = vadd.f32 %v796, 0.2548296
    %v813 = vadd.f32 %v797, 0.2548296
    %v814 = vadd.f32 %v798, 0.2548296
    %v815 = vadd.f32 %v799, 0.2548296
    %v816 = vadd.f32 %v800, 0.2548296
    %v817 = vadd.f32 %v801, 0.2548296
    %v818 = vadd.f32 %v802, 0.2548296
    %v819 = vadd.f32 %v803, 0.2548296
    %v820 = vadd.f32 %v804, 0.2548296
    %v821 = vadd.f32 %v805, 0.2548296
    %v822 = vadd.f32 %v806, 0.2548296
    %v823 = vadd.f32 %v807, 0.2548296
    %v824 = vadd.f32 %v808, 0.2548296
    %v825 = vadd.f32 %v809, 0.2548296
    %v826 = vadd.f32 %v810, 0.2548296
    %v827 = vadd.f32 %v811, 0.2548296
    %v828 = vmul.f32 %v812, %v669
    %v829 = vmul.f32 %v813, %v671
    %v830 = vmul.f32 %v814, %v673
    %v831 = vmul.f32 %v815, %v675
    %v832 = vmul.f32 %v816, %v677
    %v833 = vmul.f32 %v817, %v679
    %v834 = vmul.f32 %v818, %v681
    %v835 = vmul.f32 %v819, %v683
    %v836 = vmul.f32 %v820, %v685
    %v837 = vmul.f32 %v821, %v687
    %v838 = vmul.f32 %v822, %v689
    %v839 = vmul.f32 %v823, %v691
    %v840 = vmul.f32 %v824, %v693
    %v841 = vmul.f32 %v825, %v695
    %v842 = vmul.f32 %v826, %v697
    %v843 = vmul.f32 %v827, %v699
    %v844 = vsub.f32 0.0, %v620
    %v845 = vsub.f32 0.0, %v621
    %v846 = vsub.f32 0.0, %v622
    %v847 = vsub.f32 0.0, %v623
    %v848 = vsub.f32 0.0, %v624
    %v849 = vsub.f32 0.0, %v625
    %v850 = vsub.f32 0.0, %v626
    %v851 = vsub.f32 0.0, %v627
    %v852 = vsub.f32 0.0, %v628
    %v853 = vsub.f32 0.0, %v629
    %v854 = vsub.f32 0.0, %v630
    %v855 = vsub.f32 0.0, %v631
    %v856 = vsub.f32 0.0, %v632
    %v857 = vsub.f32 0.0, %v633
    %v858 = vsub.f32 0.0, %v634
    %v859 = vsub.f32 0.0, %v635
    %v860 = vmul.f32 %v844, %v620
    %v861 = vmul.f32 %v845, %v621
    %v862 = vmul.f32 %v846, %v622
    %v863 = vmul.f32 %v847, %v623
    %v864 = vmul.f32 %v848, %v624
    %v865 = vmul.f32 %v849, %v625
    %v866 = vmul.f32 %v850, %v626
    %v867 = vmul.f32 %v851, %v627
    %v868 = vmul.f32 %v852, %v628
    %v869 = vmul.f32 %v853, %v629
    %v870 = vmul.f32 %v854, %v630
    %v871 = vmul.f32 %v855, %v631
    %v872 = vmul.f32 %v856, %v632
    %v873 = vmul.f32 %v857, %v633
    %v874 = vmul.f32 %v858, %v634
    %v875 = vmul.f32 %v859, %v635
    %v876 = vmul.f32 %v860, 1.442695
    %v877 = vpow.pop %v876
    %v878 = vmul.f32 %v861, 1.442695
    %v879 = vpow.pop %v878
    %v880 = vmul.f32 %v862, 1.442695
    %v881 = vpow.pop %v880
    %v882 = vmul.f32 %v863, 1.442695
    %v883 = vpow.pop %v882
    %v884 = vmul.f32 %v864, 1.442695
    %v885 = vpow.pop %v884
    %v886 = vmul.f32 %v865, 1.442695
    %v887 = vpow.pop %v886
    %v888 = vmul.f32 %v866, 1.442695
    %v889 = vpow.pop %v888
    %v890 = vmul.f32 %v867, 1.442695
    %v891 = vpow.pop %v890
    %v892 = vmul.f32 %v868, 1.442695
    %v893 = vpow.pop %v892
    %v894 = vmul.f32 %v869, 1.442695
    %v895 = vpow.pop %v894
    %v896 = vmul.f32 %v870, 1.442695
    %v897 = vpow.pop %v896
    %v898 = vmul.f32 %v871, 1.442695
    %v899 = vpow.pop %v898
    %v900 = vmul.f32 %v872, 1.442695
    %v901 = vpow.pop %v900
    %v902 = vmul.f32 %v873, 1.442695
    %v903 = vpow.pop %v902
    %v904 = vmul.f32 %v874, 1.442695
    %v905 = vpow.pop %v904
    %v906 = vmul.f32 %v875, 1.442695
    %v907 = vpow.pop %v906
    %v908 = vmul.f32 %v828, %v877
    %v909 = vmul.f32 %v829, %v879
    %v910 = vmul.f32 %v830, %v881
    %v911 = vmul.f32 %v831, %v883
    %v912 = vmul.f32 %v832, %v885
    %v913 = vmul.f32 %v833, %v887
    %v914 = vmul.f32 %v834, %v889
    %v915 = vmul.f32 %v835, %v891
    %v916 = vmul.f32 %v836, %v893
    %v917 = vmul.f32 %v837, %v895
    %v918 = vmul.f32 %v838, %v897
    %v919 = vmul.f32 %v839, %v899
    %v920 = vmul.f32 %v840, %v901
    %v921 = vmul.f32 %v841, %v903
    %v922 = vmul.f32 %v842, %v905
    %v923 = vmul.f32 %v843, %v907
    %v924 = vsub.f32 1.0, %v908
    %v925 = vsub.f32 1.0, %v909
    %v926 = vsub.f32 1.0, %v910
    %v927 = vsub.f32 1.0, %v911
    %v928 = vsub.f32 1.0, %v912
    %v929 = vsub.f32 1.0, %v913
    %v930 = vsub.f32 1.0, %v914
    %v931 = vsub.f32 1.0, %v915
    %v932 = vsub.f32 1.0, %v916
    %v933 = vsub.f32 1.0, %v917
    %v934 = vsub.f32 1.0, %v918
    %v935 = vsub.f32 1.0, %v919
    %v936 = vsub.f32 1.0, %v920
    %v937 = vsub.f32 1.0, %v921
    %v938 = vsub.f32 1.0, %v922
    %v939 = vsub.f32 1.0, %v923
    %v940 = vmul.f32 %v604, %v924
    %v941 = vmul.f32 %v605, %v925
    %v942 = vmul.f32 %v606, %v926
    %v943 = vmul.f32 %v607, %v927
    %v944 = vmul.f32 %v608, %v928
    %v945 = vmul.f32 %v609, %v929
    %v946 = vmul.f32 %v610, %v930
    %v947 = vmul.f32 %v611, %v931
    %v948 = vmul.f32 %v612, %v932
    %v949 = vmul.f32 %v613, %v933
    %v950 = vmul.f32 %v614, %v934
    %v951 = vmul.f32 %v615, %v935
    %v952 = vmul.f32 %v616, %v936
    %v953 = vmul.f32 %v617, %v937
    %v954 = vmul.f32 %v618, %v938
    %v955 = vmul.f32 %v619, %v939
    %v956 = vadd.f32 %v940, 1.0
    %v957 = vadd.f32 %v941, 1.0
    %v958 = vadd.f32 %v942, 1.0
    %v959 = vadd.f32 %v943, 1.0
    %v960 = vadd.f32 %v944, 1.0
    %v961 = vadd.f32 %v945, 1.0
    %v962 = vadd.f32 %v946, 1.0
    %v963 = vadd.f32 %v947, 1.0
    %v964 = vadd.f32 %v948, 1.0
    %v965 = vadd.f32 %v949, 1.0
    %v966 = vadd.f32 %v950, 1.0
    %v967 = vadd.f32 %v951, 1.0
    %v968 = vadd.f32 %v952, 1.0
    %v969 = vadd.f32 %v953, 1.0
    %v970 = vadd.f32 %v954, 1.0
    %v971 = vadd.f32 %v955, 1.0
    %v972 = vmul.f32 %v556, %v956
    %v973 = vmul.f32 %v557, %v957
    %v974 = vmul.f32 %v558, %v958
    %v975 = vmul.f32 %v559, %v959
    %v976 = vmul.f32 %v560, %v960
    %v977 = vmul.f32 %v561, %v961
    %v978 = vmul.f32 %v562, %v962
    %v979 = vmul.f32 %v563, %v963
    %v980 = vmul.f32 %v564, %v964
    %v981 = vmul.f32 %v565, %v965
    %v982 = vmul.f32 %v566, %v966
    %v983 = vmul.f32 %v567, %v967
    %v984 = vmul.f32 %v568, %v968
    %v985 = vmul.f32 %v569, %v969
    %v986 = vmul.f32 %v570, %v970
    %v987 = vmul.f32 %v571, %v971
    %v988 = vld [vmem:[%s6] sm:$0xff]
    %v989 = vld [vmem:[%s6 + $0x8] sm:$0xff]
    %v990 = vld [vmem:[%s6 + $0x10] sm:$0xff]
    %v991 = vld [vmem:[%s6 + $0x18] sm:$0xff]
    %v992 = vld [vmem:[%s7] sm:$0x1]
    %v994 = vlaneseq
    %v995 = vshrl.u32 %v994, 7
    %v996 = vsub.s32 0, %v995
    %v997 = vrot.slane %v992, %v996
    %999 = vmatprep.subr.mxu0 0.0
    %1000 = vmatpush1.msra.mxu0 %v988
    %1001 = vmatprep.subr.mxu0 0.0
    %1002 = vmatpush1.msra.mxu0 %v989
    %1003 = vmatprep.subr.mxu0 0.0
    %1004 = vmatpush1.msra.mxu0 %v990
    %1005 = vmatprep.subr.mxu0 0.0
    %1006 = vmatpush1.msra.mxu0 %v991
    %1007 = vmatprep.subr.mxu0 0.0
    %1008 = vmatpush1.msra.mxu0 0.0
    %1009 = vmatprep.subr.mxu0 0.0
    %1010 = vmatpush1.msra.mxu0 0.0
    %1011 = vmatprep.subr.mxu0 0.0
    %1012 = vmatpush1.msra.mxu0 0.0
    %1013 = vmatprep.subr.mxu0 0.0
    %1014 = vmatpush1.msra.mxu0 0.0
    %1015 = vmatprep.subr.mxu0 0.0
    %1016 = vmatpush1.msra.mxu0 0.0
    %1017 = vmatprep.subr.mxu0 0.0
    %1018 = vmatpush1.msra.mxu0 0.0
    %1019 = vmatprep.subr.mxu0 0.0
    %1020 = vmatpush1.msra.mxu0 0.0
    %1021 = vmatprep.subr.mxu0 0.0
    %1022 = vmatpush1.msra.mxu0 0.0
    %1023 = vmatprep.subr.mxu0 0.0
    %1024 = vmatpush1.msra.mxu0 0.0
    %1025 = vmatprep.subr.mxu0 0.0
    %1026 = vmatpush1.msra.mxu0 0.0
    %1027 = vmatprep.subr.mxu0 0.0
    %1028 = vmatpush1.msra.mxu0 0.0
    %1029 = vmatprep.subr.mxu0 0.0
    %1030 = vmatpush1.msra.mxu0 0.0
    %1031 = vmatprep.subr.mxu0 0.0
    %1032 = vmatpush1.msra.mxu0 0.0
    %1033 = vmatprep.subr.mxu0 0.0
    %1034 = vmatpush1.msra.mxu0 0.0
    %1035 = vmatprep.subr.mxu0 0.0
    %1036 = vmatpush1.msra.mxu0 0.0
    %1037 = vmatprep.subr.mxu0 0.0
    %1038 = vmatpush1.msra.mxu0 0.0
    %1039 = vmatprep.subr.mxu0 0.0
    %1040 = vmatpush1.msra.mxu0 0.0
    %1041 = vmatprep.subr.mxu0 0.0
    %1042 = vmatpush1.msra.mxu0 0.0
    %1043 = vmatprep.subr.mxu0 0.0
    %1044 = vmatpush1.msra.mxu0 0.0
    %1045 = vmatprep.subr.mxu0 0.0
    %1046 = vmatpush1.msra.mxu0 0.0
    %1047 = vmatprep.subr.mxu0 0.0
    %1048 = vmatpush1.msra.mxu0 0.0
    %1049 = vmatprep.subr.mxu0 0.0
    %1050 = vmatpush1.msra.mxu0 0.0
    %1051 = vmatprep.subr.mxu0 0.0
    %1052 = vmatpush1.msra.mxu0 0.0
    %1053 = vmatprep.subr.mxu0 0.0
    %1054 = vmatpush1.msra.mxu0 0.0
    %1055 = vmatprep.subr.mxu0 0.0
    %1056 = vmatpush1.msra.mxu0 0.0
    %1057 = vmatprep.subr.mxu0 0.0
    %1058 = vmatpush1.msra.mxu0 0.0
    %1059 = vmatprep.subr.mxu0 0.0
    %1060 = vmatpush1.msra.mxu0 0.0
    %1061 = vmatprep.subr.mxu0 0.0
    %1062 = vmatpush1.msra.mxu0 0.0
    %1063 = vmatprep.mubr.f32.mxu0 0.0
    %1064 = vmatmul.mubr.f32.gmra.mrb[0].mxu0 %v364
    %v1065 = vpop.f32.mrb[0].mxu0
    %v1066 = vadd.f32 %v997, %v1065
    %v1067 = vpop.f32.mrb[0].mxu0
    %1068 = vmatprep.mubr.f32.mxu0 0.0
    %1069 = vmatmul.mubr.f32.gmra.mrb[0].mxu0 %v367
    %v1070 = vpop.f32.mrb[0].mxu0
    %v1071 = vadd.f32 %v997, %v1070
    %v1072 = vpop.f32.mrb[0].mxu0
    %1073 = vmatprep.mubr.f32.mxu0 0.0
    %1074 = vmatmul.mubr.f32.gmra.mrb[0].mxu0 %v370
    %v1075 = vpop.f32.mrb[0].mxu0
    %v1076 = vadd.f32 %v997, %v1075
    %v1077 = vpop.f32.mrb[0].mxu0
    %1078 = vmatprep.mubr.f32.mxu0 0.0
    %1079 = vmatmul.mubr.f32.gmra.mrb[0].mxu0 %v373
    %v1080 = vpop.f32.mrb[0].mxu0
    %v1081 = vadd.f32 %v997, %v1080
    %v1082 = vpop.f32.mrb[0].mxu0
    %1083 = vmatprep.mubr.f32.mxu0 0.0
    %1084 = vmatmul.mubr.f32.gmra.mrb[0].mxu0 %v376
    %v1085 = vpop.f32.mrb[0].mxu0
    %v1086 = vadd.f32 %v997, %v1085
    %v1087 = vpop.f32.mrb[0].mxu0
    %1088 = vmatprep.mubr.f32.mxu0 0.0
    %1089 = vmatmul.mubr.f32.gmra.mrb[0].mxu0 %v379
    %v1090 = vpop.f32.mrb[0].mxu0
    %v1091 = vadd.f32 %v997, %v1090
    %v1092 = vpop.f32.mrb[0].mxu0
    %1093 = vmatprep.mubr.f32.mxu0 0.0
    %1094 = vmatmul.mubr.f32.gmra.mrb[0].mxu0 %v382
    %v1095 = vpop.f32.mrb[0].mxu0
    %v1096 = vadd.f32 %v997, %v1095
    %v1097 = vpop.f32.mrb[0].mxu0
    %1098 = vmatprep.mubr.f32.mxu0 0.0
    %1099 = vmatmul.mubr.f32.gmra.mrb[0].mxu0 %v385
    %v1100 = vpop.f32.mrb[0].mxu0
    %v1101 = vadd.f32 %v997, %v1100
    %v1102 = vpop.f32.mrb[0].mxu0
    %1103 = vmatprep.mubr.f32.mxu0 0.0
    %1104 = vmatmul.mubr.f32.gmra.mrb[0].mxu0 %v388
    %v1105 = vpop.f32.mrb[0].mxu0
    %v1106 = vadd.f32 %v997, %v1105
    %v1107 = vpop.f32.mrb[0].mxu0
    %1108 = vmatprep.mubr.f32.mxu0 0.0
    %1109 = vmatmul.mubr.f32.gmra.mrb[0].mxu0 %v391
    %v1110 = vpop.f32.mrb[0].mxu0
    %v1111 = vadd.f32 %v997, %v1110
    %v1112 = vpop.f32.mrb[0].mxu0
    %1113 = vmatprep.mubr.f32.mxu0 0.0
    %1114 = vmatmul.mubr.f32.gmra.mrb[0].mxu0 %v394
    %v1115 = vpop.f32.mrb[0].mxu0
    %v1116 = vadd.f32 %v997, %v1115
    %v1117 = vpop.f32.mrb[0].mxu0
    %1118 = vmatprep.mubr.f32.mxu0 0.0
    %1119 = vmatmul.mubr.f32.gmra.mrb[0].mxu0 %v397
    %v1120 = vpop.f32.mrb[0].mxu0
    %v1121 = vadd.f32 %v997, %v1120
    %v1122 = vpop.f32.mrb[0].mxu0
    %1123 = vmatprep.mubr.f32.mxu0 0.0
    %1124 = vmatmul.mubr.f32.gmra.mrb[0].mxu0 %v400
    %v1125 = vpop.f32.mrb[0].mxu0
    %v1126 = vadd.f32 %v997, %v1125
    %v1127 = vpop.f32.mrb[0].mxu0
    %1128 = vmatprep.mubr.f32.mxu0 0.0
    %1129 = vmatmul.mubr.f32.gmra.mrb[0].mxu0 %v403
    %v1130 = vpop.f32.mrb[0].mxu0
    %v1131 = vadd.f32 %v997, %v1130
    %v1132 = vpop.f32.mrb[0].mxu0
    %1133 = vmatprep.mubr.f32.mxu0 0.0
    %1134 = vmatmul.mubr.f32.gmra.mrb[0].mxu0 %v406
    %v1135 = vpop.f32.mrb[0].mxu0
    %v1136 = vadd.f32 %v997, %v1135
    %v1137 = vpop.f32.mrb[0].mxu0
    %1138 = vmatprep.mubr.f32.mxu0 0.0
    %1139 = vmatmul.mubr.f32.gmra.mrb[0].mxu0 %v409
    %v1140 = vpop.f32.mrb[0].mxu0
    %v1141 = vadd.f32 %v997, %v1140
    %v1142 = vpop.f32.mrb[0].mxu0
    %1143 = vdwg.mxu0
    %v1144 = vmul.f32 %v1066, 0.5
    %v1145 = vmul.f32 %v1071, 0.5
    %v1146 = vmul.f32 %v1076, 0.5
    %v1147 = vmul.f32 %v1081, 0.5
    %v1148 = vmul.f32 %v1086, 0.5
    %v1149 = vmul.f32 %v1091, 0.5
    %v1150 = vmul.f32 %v1096, 0.5
    %v1151 = vmul.f32 %v1101, 0.5
    %v1152 = vmul.f32 %v1106, 0.5
    %v1153 = vmul.f32 %v1111, 0.5
    %v1154 = vmul.f32 %v1116, 0.5
    %v1155 = vmul.f32 %v1121, 0.5
    %v1156 = vmul.f32 %v1126, 0.5
    %v1157 = vmul.f32 %v1131, 0.5
    %v1158 = vmul.f32 %v1136, 0.5
    %v1159 = vmul.f32 %v1141, 0.5
    %v1160 = vmul.f32 %v1066, 0.70710677
    %v1161 = vmul.f32 %v1071, 0.70710677
    %v1162 = vmul.f32 %v1076, 0.70710677
    %v1163 = vmul.f32 %v1081, 0.70710677
    %v1164 = vmul.f32 %v1086, 0.70710677
    %v1165 = vmul.f32 %v1091, 0.70710677
    %v1166 = vmul.f32 %v1096, 0.70710677
    %v1167 = vmul.f32 %v1101, 0.70710677
    %v1168 = vmul.f32 %v1106, 0.70710677
    %v1169 = vmul.f32 %v1111, 0.70710677
    %v1170 = vmul.f32 %v1116, 0.70710677
    %v1171 = vmul.f32 %v1121, 0.70710677
    %v1172 = vmul.f32 %v1126, 0.70710677
    %v1173 = vmul.f32 %v1131, 0.70710677
    %v1174 = vmul.f32 %v1136, 0.70710677
    %v1175 = vmul.f32 %v1141, 0.70710677
    %vm1176 = vcmp.lt.f32.partialorder %v1160, 0.0
    %vm1177 = vcmp.lt.f32.partialorder %v1161, 0.0
    %vm1178 = vcmp.lt.f32.partialorder %v1162, 0.0
    %vm1179 = vcmp.lt.f32.partialorder %v1163, 0.0
    %vm1180 = vcmp.lt.f32.partialorder %v1164, 0.0
    %vm1181 = vcmp.lt.f32.partialorder %v1165, 0.0
    %vm1182 = vcmp.lt.f32.partialorder %v1166, 0.0
    %vm1183 = vcmp.lt.f32.partialorder %v1167, 0.0
    %vm1184 = vcmp.lt.f32.partialorder %v1168, 0.0
    %vm1185 = vcmp.lt.f32.partialorder %v1169, 0.0
    %vm1186 = vcmp.lt.f32.partialorder %v1170, 0.0
    %vm1187 = vcmp.lt.f32.partialorder %v1171, 0.0
    %vm1188 = vcmp.lt.f32.partialorder %v1172, 0.0
    %vm1189 = vcmp.lt.f32.partialorder %v1173, 0.0
    %vm1190 = vcmp.lt.f32.partialorder %v1174, 0.0
    %vm1191 = vcmp.lt.f32.partialorder %v1175, 0.0
    %v1192 = vsel %vm1176, -1.0, 1.0
    %v1193 = vsel %vm1177, -1.0, 1.0
    %v1194 = vsel %vm1178, -1.0, 1.0
    %v1195 = vsel %vm1179, -1.0, 1.0
    %v1196 = vsel %vm1180, -1.0, 1.0
    %v1197 = vsel %vm1181, -1.0, 1.0
    %v1198 = vsel %vm1182, -1.0, 1.0
    %v1199 = vsel %vm1183, -1.0, 1.0
    %v1200 = vsel %vm1184, -1.0, 1.0
    %v1201 = vsel %vm1185, -1.0, 1.0
    %v1202 = vsel %vm1186, -1.0, 1.0
    %v1203 = vsel %vm1187, -1.0, 1.0
    %v1204 = vsel %vm1188, -1.0, 1.0
    %v1205 = vsel %vm1189, -1.0, 1.0
    %v1206 = vsel %vm1190, -1.0, 1.0
    %v1207 = vsel %vm1191, -1.0, 1.0
    %v1208 = vand.u32 2147483647, %v1160
    %v1209 = vand.u32 2147483647, %v1161
    %v1210 = vand.u32 2147483647, %v1162
    %v1211 = vand.u32 2147483647, %v1163
    %v1212 = vand.u32 2147483647, %v1164
    %v1213 = vand.u32 2147483647, %v1165
    %v1214 = vand.u32 2147483647, %v1166
    %v1215 = vand.u32 2147483647, %v1167
    %v1216 = vand.u32 2147483647, %v1168
    %v1217 = vand.u32 2147483647, %v1169
    %v1218 = vand.u32 2147483647, %v1170
    %v1219 = vand.u32 2147483647, %v1171
    %v1220 = vand.u32 2147483647, %v1172
    %v1221 = vand.u32 2147483647, %v1173
    %v1222 = vand.u32 2147483647, %v1174
    %v1223 = vand.u32 2147483647, %v1175
    %v1224 = vmul.f32 %v1208, 0.3275911
    %v1225 = vmul.f32 %v1209, 0.3275911
    %v1226 = vmul.f32 %v1210, 0.3275911
    %v1227 = vmul.f32 %v1211, 0.3275911
    %v1228 = vmul.f32 %v1212, 0.3275911
    %v1229 = vmul.f32 %v1213, 0.3275911
    %v1230 = vmul.f32 %v1214, 0.3275911
    %v1231 = vmul.f32 %v1215, 0.3275911
    %v1232 = vmul.f32 %v1216, 0.3275911
    %v1233 = vmul.f32 %v1217, 0.3275911
    %v1234 = vmul.f32 %v1218, 0.3275911
    %v1235 = vmul.f32 %v1219, 0.3275911
    %v1236 = vmul.f32 %v1220, 0.3275911
    %v1237 = vmul.f32 %v1221, 0.3275911
    %v1238 = vmul.f32 %v1222, 0.3275911
    %v1239 = vmul.f32 %v1223, 0.3275911
    %v1240 = vadd.f32 %v1224, 1.0
    %v1241 = vadd.f32 %v1225, 1.0
    %v1242 = vadd.f32 %v1226, 1.0
    %v1243 = vadd.f32 %v1227, 1.0
    %v1244 = vadd.f32 %v1228, 1.0
    %v1245 = vadd.f32 %v1229, 1.0
    %v1246 = vadd.f32 %v1230, 1.0
    %v1247 = vadd.f32 %v1231, 1.0
    %v1248 = vadd.f32 %v1232, 1.0
    %v1249 = vadd.f32 %v1233, 1.0
    %v1250 = vadd.f32 %v1234, 1.0
    %v1251 = vadd.f32 %v1235, 1.0
    %v1252 = vadd.f32 %v1236, 1.0
    %v1253 = vadd.f32 %v1237, 1.0
    %v1254 = vadd.f32 %v1238, 1.0
    %v1255 = vadd.f32 %v1239, 1.0
    %v1256 = vrcp.pop %v1240
    %v1257 = vmul.f32 1.0, %v1256
    %v1258 = vrcp.pop %v1241
    %v1259 = vmul.f32 1.0, %v1258
    %v1260 = vrcp.pop %v1242
    %v1261 = vmul.f32 1.0, %v1260
    %v1262 = vrcp.pop %v1243
    %v1263 = vmul.f32 1.0, %v1262
    %v1264 = vrcp.pop %v1244
    %v1265 = vmul.f32 1.0, %v1264
    %v1266 = vrcp.pop %v1245
    %v1267 = vmul.f32 1.0, %v1266
    %v1268 = vrcp.pop %v1246
    %v1269 = vmul.f32 1.0, %v1268
    %v1270 = vrcp.pop %v1247
    %v1271 = vmul.f32 1.0, %v1270
    %v1272 = vrcp.pop %v1248
    %v1273 = vmul.f32 1.0, %v1272
    %v1274 = vrcp.pop %v1249
    %v1275 = vmul.f32 1.0, %v1274
    %v1276 = vrcp.pop %v1250
    %v1277 = vmul.f32 1.0, %v1276
    %v1278 = vrcp.pop %v1251
    %v1279 = vmul.f32 1.0, %v1278
    %v1280 = vrcp.pop %v1252
    %v1281 = vmul.f32 1.0, %v1280
    %v1282 = vrcp.pop %v1253
    %v1283 = vmul.f32 1.0, %v1282
    %v1284 = vrcp.pop %v1254
    %v1285 = vmul.f32 1.0, %v1284
    %v1286 = vrcp.pop %v1255
    %v1287 = vmul.f32 1.0, %v1286
    %v1288 = vmul.f32 %v1257, 1.0614054
    %v1289 = vmul.f32 %v1259, 1.0614054
    %v1290 = vmul.f32 %v1261, 1.0614054
    %v1291 = vmul.f32 %v1263, 1.0614054
    %v1292 = vmul.f32 %v1265, 1.0614054
    %v1293 = vmul.f32 %v1267, 1.0614054
    %v1294 = vmul.f32 %v1269, 1.0614054
    %v1295 = vmul.f32 %v1271, 1.0614054
    %v1296 = vmul.f32 %v1273, 1.0614054
    %v1297 = vmul.f32 %v1275, 1.0614054
    %v1298 = vmul.f32 %v1277, 1.0614054
    %v1299 = vmul.f32 %v1279, 1.0614054
    %v1300 = vmul.f32 %v1281, 1.0614054
    %v1301 = vmul.f32 %v1283, 1.0614054
    %v1302 = vmul.f32 %v1285, 1.0614054
    %v1303 = vmul.f32 %v1287, 1.0614054
    %v1304 = vadd.f32 %v1288, -1.4531521
    %v1305 = vadd.f32 %v1289, -1.4531521
    %v1306 = vadd.f32 %v1290, -1.4531521
    %v1307 = vadd.f32 %v1291, -1.4531521
    %v1308 = vadd.f32 %v1292, -1.4531521
    %v1309 = vadd.f32 %v1293, -1.4531521
    %v1310 = vadd.f32 %v1294, -1.4531521
    %v1311 = vadd.f32 %v1295, -1.4531521
    %v1312 = vadd.f32 %v1296, -1.4531521
    %v1313 = vadd.f32 %v1297, -1.4531521
    %v1314 = vadd.f32 %v1298, -1.4531521
    %v1315 = vadd.f32 %v1299, -1.4531521
    %v1316 = vadd.f32 %v1300, -1.4531521
    %v1317 = vadd.f32 %v1301, -1.4531521
    %v1318 = vadd.f32 %v1302, -1.4531521
    %v1319 = vadd.f32 %v1303, -1.4531521
    %v1320 = vmul.f32 %v1304, %v1257
    %v1321 = vmul.f32 %v1305, %v1259
    %v1322 = vmul.f32 %v1306, %v1261
    %v1323 = vmul.f32 %v1307, %v1263
    %v1324 = vmul.f32 %v1308, %v1265
    %v1325 = vmul.f32 %v1309, %v1267
    %v1326 = vmul.f32 %v1310, %v1269
    %v1327 = vmul.f32 %v1311, %v1271
    %v1328 = vmul.f32 %v1312, %v1273
    %v1329 = vmul.f32 %v1313, %v1275
    %v1330 = vmul.f32 %v1314, %v1277
    %v1331 = vmul.f32 %v1315, %v1279
    %v1332 = vmul.f32 %v1316, %v1281
    %v1333 = vmul.f32 %v1317, %v1283
    %v1334 = vmul.f32 %v1318, %v1285
    %v1335 = vmul.f32 %v1319, %v1287
    %v1336 = vadd.f32 %v1320, 1.4214138
    %v1337 = vadd.f32 %v1321, 1.4214138
    %v1338 = vadd.f32 %v1322, 1.4214138
    %v1339 = vadd.f32 %v1323, 1.4214138
    %v1340 = vadd.f32 %v1324, 1.4214138
    %v1341 = vadd.f32 %v1325, 1.4214138
    %v1342 = vadd.f32 %v1326, 1.4214138
    %v1343 = vadd.f32 %v1327, 1.4214138
    %v1344 = vadd.f32 %v1328, 1.4214138
    %v1345 = vadd.f32 %v1329, 1.4214138
    %v1346 = vadd.f32 %v1330, 1.4214138
    %v1347 = vadd.f32 %v1331, 1.4214138
    %v1348 = vadd.f32 %v1332, 1.4214138
    %v1349 = vadd.f32 %v1333, 1.4214138
    %v1350 = vadd.f32 %v1334, 1.4214138
    %v1351 = vadd.f32 %v1335, 1.4214138
    %v1352 = vmul.f32 %v1336, %v1257
    %v1353 = vmul.f32 %v1337, %v1259
    %v1354 = vmul.f32 %v1338, %v1261
    %v1355 = vmul.f32 %v1339, %v1263
    %v1356 = vmul.f32 %v1340, %v1265
    %v1357 = vmul.f32 %v1341, %v1267
    %v1358 = vmul.f32 %v1342, %v1269
    %v1359 = vmul.f32 %v1343, %v1271
    %v1360 = vmul.f32 %v1344, %v1273
    %v1361 = vmul.f32 %v1345, %v1275
    %v1362 = vmul.f32 %v1346, %v1277
    %v1363 = vmul.f32 %v1347, %v1279
    %v1364 = vmul.f32 %v1348, %v1281
    %v1365 = vmul.f32 %v1349, %v1283
    %v1366 = vmul.f32 %v1350, %v1285
    %v1367 = vmul.f32 %v1351, %v1287
    %v1368 = vadd.f32 %v1352, -0.28449672
    %v1369 = vadd.f32 %v1353, -0.28449672
    %v1370 = vadd.f32 %v1354, -0.28449672
    %v1371 = vadd.f32 %v1355, -0.28449672
    %v1372 = vadd.f32 %v1356, -0.28449672
    %v1373 = vadd.f32 %v1357, -0.28449672
    %v1374 = vadd.f32 %v1358, -0.28449672
    %v1375 = vadd.f32 %v1359, -0.28449672
    %v1376 = vadd.f32 %v1360, -0.28449672
    %v1377 = vadd.f32 %v1361, -0.28449672
    %v1378 = vadd.f32 %v1362, -0.28449672
    %v1379 = vadd.f32 %v1363, -0.28449672
    %v1380 = vadd.f32 %v1364, -0.28449672
    %v1381 = vadd.f32 %v1365, -0.28449672
    %v1382 = vadd.f32 %v1366, -0.28449672
    %v1383 = vadd.f32 %v1367, -0.28449672
    %v1384 = vmul.f32 %v1368, %v1257
    %v1385 = vmul.f32 %v1369, %v1259
    %v1386 = vmul.f32 %v1370, %v1261
    %v1387 = vmul.f32 %v1371, %v1263
    %v1388 = vmul.f32 %v1372, %v1265
    %v1389 = vmul.f32 %v1373, %v1267
    %v1390 = vmul.f32 %v1374, %v1269
    %v1391 = vmul.f32 %v1375, %v1271
    %v1392 = vmul.f32 %v1376, %v1273
    %v1393 = vmul.f32 %v1377, %v1275
    %v1394 = vmul.f32 %v1378, %v1277
    %v1395 = vmul.f32 %v1379, %v1279
    %v1396 = vmul.f32 %v1380, %v1281
    %v1397 = vmul.f32 %v1381, %v1283
    %v1398 = vmul.f32 %v1382, %v1285
    %v1399 = vmul.f32 %v1383, %v1287
    %v1400 = vadd.f32 %v1384, 0.2548296
    %v1401 = vadd.f32 %v1385, 0.2548296
    %v1402 = vadd.f32 %v1386, 0.2548296
    %v1403 = vadd.f32 %v1387, 0.2548296
    %v1404 = vadd.f32 %v1388, 0.2548296
    %v1405 = vadd.f32 %v1389, 0.2548296
    %v1406 = vadd.f32 %v1390, 0.2548296
    %v1407 = vadd.f32 %v1391, 0.2548296
    %v1408 = vadd.f32 %v1392, 0.2548296
    %v1409 = vadd.f32 %v1393, 0.2548296
    %v1410 = vadd.f32 %v1394, 0.2548296
    %v1411 = vadd.f32 %v1395, 0.2548296
    %v1412 = vadd.f32 %v1396, 0.2548296
    %v1413 = vadd.f32 %v1397, 0.2548296
    %v1414 = vadd.f32 %v1398, 0.2548296
    %v1415 = vadd.f32 %v1399, 0.2548296
    %v1416 = vmul.f32 %v1400, %v1257
    %v1417 = vmul.f32 %v1401, %v1259
    %v1418 = vmul.f32 %v1402, %v1261
    %v1419 = vmul.f32 %v1403, %v1263
    %v1420 = vmul.f32 %v1404, %v1265
    %v1421 = vmul.f32 %v1405, %v1267
    %v1422 = vmul.f32 %v1406, %v1269
    %v1423 = vmul.f32 %v1407, %v1271
    %v1424 = vmul.f32 %v1408, %v1273
    %v1425 = vmul.f32 %v1409, %v1275
    %v1426 = vmul.f32 %v1410, %v1277
    %v1427 = vmul.f32 %v1411, %v1279
    %v1428 = vmul.f32 %v1412, %v1281
    %v1429 = vmul.f32 %v1413, %v1283
    %v1430 = vmul.f32 %v1414, %v1285
    %v1431 = vmul.f32 %v1415, %v1287
    %v1432 = vsub.f32 0.0, %v1208
    %v1433 = vsub.f32 0.0, %v1209
    %v1434 = vsub.f32 0.0, %v1210
    %v1435 = vsub.f32 0.0, %v1211
    %v1436 = vsub.f32 0.0, %v1212
    %v1437 = vsub.f32 0.0, %v1213
    %v1438 = vsub.f32 0.0, %v1214
    %v1439 = vsub.f32 0.0, %v1215
    %v1440 = vsub.f32 0.0, %v1216
    %v1441 = vsub.f32 0.0, %v1217
    %v1442 = vsub.f32 0.0, %v1218
    %v1443 = vsub.f32 0.0, %v1219
    %v1444 = vsub.f32 0.0, %v1220
    %v1445 = vsub.f32 0.0, %v1221
    %v1446 = vsub.f32 0.0, %v1222
    %v1447 = vsub.f32 0.0, %v1223
    %v1448 = vmul.f32 %v1432, %v1208
    %v1449 = vmul.f32 %v1433, %v1209
    %v1450 = vmul.f32 %v1434, %v1210
    %v1451 = vmul.f32 %v1435, %v1211
    %v1452 = vmul.f32 %v1436, %v1212
    %v1453 = vmul.f32 %v1437, %v1213
    %v1454 = vmul.f32 %v1438, %v1214
    %v1455 = vmul.f32 %v1439, %v1215
    %v1456 = vmul.f32 %v1440, %v1216
    %v1457 = vmul.f32 %v1441, %v1217
    %v1458 = vmul.f32 %v1442, %v1218
    %v1459 = vmul.f32 %v1443, %v1219
    %v1460 = vmul.f32 %v1444, %v1220
    %v1461 = vmul.f32 %v1445, %v1221
    %v1462 = vmul.f32 %v1446, %v1222
    %v1463 = vmul.f32 %v1447, %v1223
    %v1464 = vmul.f32 %v1448, 1.442695
    %v1465 = vpow.pop %v1464
    %v1466 = vmul.f32 %v1449, 1.442695
    %v1467 = vpow.pop %v1466
    %v1468 = vmul.f32 %v1450, 1.442695
    %v1469 = vpow.pop %v1468
    %v1470 = vmul.f32 %v1451, 1.442695
    %v1471 = vpow.pop %v1470
    %v1472 = vmul.f32 %v1452, 1.442695
    %v1473 = vpow.pop %v1472
    %v1474 = vmul.f32 %v1453, 1.442695
    %v1475 = vpow.pop %v1474
    %v1476 = vmul.f32 %v1454, 1.442695
    %v1477 = vpow.pop %v1476
    %v1478 = vmul.f32 %v1455, 1.442695
    %v1479 = vpow.pop %v1478
    %v1480 = vmul.f32 %v1456, 1.442695
    %v1481 = vpow.pop %v1480
    %v1482 = vmul.f32 %v1457, 1.442695
    %v1483 = vpow.pop %v1482
    %v1484 = vmul.f32 %v1458, 1.442695
    %v1485 = vpow.pop %v1484
    %v1486 = vmul.f32 %v1459, 1.442695
    %v1487 = vpow.pop %v1486
    %v1488 = vmul.f32 %v1460, 1.442695
    %v1489 = vpow.pop %v1488
    %v1490 = vmul.f32 %v1461, 1.442695
    %v1491 = vpow.pop %v1490
    %v1492 = vmul.f32 %v1462, 1.442695
    %v1493 = vpow.pop %v1492
    %v1494 = vmul.f32 %v1463, 1.442695
    %v1495 = vpow.pop %v1494
    %v1496 = vmul.f32 %v1416, %v1465
    %v1497 = vmul.f32 %v1417, %v1467
    %v1498 = vmul.f32 %v1418, %v1469
    %v1499 = vmul.f32 %v1419, %v1471
    %v1500 = vmul.f32 %v1420, %v1473
    %v1501 = vmul.f32 %v1421, %v1475
    %v1502 = vmul.f32 %v1422, %v1477
    %v1503 = vmul.f32 %v1423, %v1479
    %v1504 = vmul.f32 %v1424, %v1481
    %v1505 = vmul.f32 %v1425, %v1483
    %v1506 = vmul.f32 %v1426, %v1485
    %v1507 = vmul.f32 %v1427, %v1487
    %v1508 = vmul.f32 %v1428, %v1489
    %v1509 = vmul.f32 %v1429, %v1491
    %v1510 = vmul.f32 %v1430, %v1493
    %v1511 = vmul.f32 %v1431, %v1495
    %v1512 = vsub.f32 1.0, %v1496
    %v1513 = vsub.f32 1.0, %v1497
    %v1514 = vsub.f32 1.0, %v1498
    %v1515 = vsub.f32 1.0, %v1499
    %v1516 = vsub.f32 1.0, %v1500
    %v1517 = vsub.f32 1.0, %v1501
    %v1518 = vsub.f32 1.0, %v1502
    %v1519 = vsub.f32 1.0, %v1503
    %v1520 = vsub.f32 1.0, %v1504
    %v1521 = vsub.f32 1.0, %v1505
    %v1522 = vsub.f32 1.0, %v1506
    %v1523 = vsub.f32 1.0, %v1507
    %v1524 = vsub.f32 1.0, %v1508
    %v1525 = vsub.f32 1.0, %v1509
    %v1526 = vsub.f32 1.0, %v1510
    %v1527 = vsub.f32 1.0, %v1511
    %v1528 = vmul.f32 %v1192, %v1512
    %v1529 = vmul.f32 %v1193, %v1513
    %v1530 = vmul.f32 %v1194, %v1514
    %v1531 = vmul.f32 %v1195, %v1515
    %v1532 = vmul.f32 %v1196, %v1516
    %v1533 = vmul.f32 %v1197, %v1517
    %v1534 = vmul.f32 %v1198, %v1518
    %v1535 = vmul.f32 %v1199, %v1519
    %v1536 = vmul.f32 %v1200, %v1520
    %v1537 = vmul.f32 %v1201, %v1521
    %v1538 = vmul.f32 %v1202, %v1522
    %v1539 = vmul.f32 %v1203, %v1523
    %v1540 = vmul.f32 %v1204, %v1524
    %v1541 = vmul.f32 %v1205, %v1525
    %v1542 = vmul.f32 %v1206, %v1526
    %v1543 = vmul.f32 %v1207, %v1527
    %v1544 = vadd.f32 %v1528, 1.0
    %v1545 = vadd.f32 %v1529, 1.0
    %v1546 = vadd.f32 %v1530, 1.0
    %v1547 = vadd.f32 %v1531, 1.0
    %v1548 = vadd.f32 %v1532, 1.0
    %v1549 = vadd.f32 %v1533, 1.0
    %v1550 = vadd.f32 %v1534, 1.0
    %v1551 = vadd.f32 %v1535, 1.0
    %v1552 = vadd.f32 %v1536, 1.0
    %v1553 = vadd.f32 %v1537, 1.0
    %v1554 = vadd.f32 %v1538, 1.0
    %v1555 = vadd.f32 %v1539, 1.0
    %v1556 = vadd.f32 %v1540, 1.0
    %v1557 = vadd.f32 %v1541, 1.0
    %v1558 = vadd.f32 %v1542, 1.0
    %v1559 = vadd.f32 %v1543, 1.0
    %v1560 = vmul.f32 %v1144, %v1544
    %v1561 = vmul.f32 %v1145, %v1545
    %v1562 = vmul.f32 %v1146, %v1546
    %v1563 = vmul.f32 %v1147, %v1547
    %v1564 = vmul.f32 %v1148, %v1548
    %v1565 = vmul.f32 %v1149, %v1549
    %v1566 = vmul.f32 %v1150, %v1550
    %v1567 = vmul.f32 %v1151, %v1551
    %v1568 = vmul.f32 %v1152, %v1552
    %v1569 = vmul.f32 %v1153, %v1553
    %v1570 = vmul.f32 %v1154, %v1554
    %v1571 = vmul.f32 %v1155, %v1555
    %v1572 = vmul.f32 %v1156, %v1556
    %v1573 = vmul.f32 %v1157, %v1557
    %v1574 = vmul.f32 %v1158, %v1558
    %v1575 = vmul.f32 %v1159, %v1559
    %vm1576 = vcmask 130048
    %1577 = vst.msk [vmem:[%s8] sm:$0xff] %vm1576, %v972
    %1578 = vst.msk [vmem:[%s8 + $0x8] sm:$0xff] %vm1576, %v973
    %1579 = vst.msk [vmem:[%s8 + $0x10] sm:$0xff] %vm1576, %v974
    %1580 = vst.msk [vmem:[%s8 + $0x18] sm:$0xff] %vm1576, %v975
    %1581 = vst.msk [vmem:[%s8 + $0x20] sm:$0xff] %vm1576, %v976
    %1582 = vst.msk [vmem:[%s8 + $0x28] sm:$0xff] %vm1576, %v977
    %1583 = vst.msk [vmem:[%s8 + $0x30] sm:$0xff] %vm1576, %v978
    %1584 = vst.msk [vmem:[%s8 + $0x38] sm:$0xff] %vm1576, %v979
    %1585 = vst.msk [vmem:[%s8 + $0x40] sm:$0xff] %vm1576, %v980
    %1586 = vst.msk [vmem:[%s8 + $0x48] sm:$0xff] %vm1576, %v981
    %1587 = vst.msk [vmem:[%s8 + $0x50] sm:$0xff] %vm1576, %v982
    %1588 = vst.msk [vmem:[%s8 + $0x58] sm:$0xff] %vm1576, %v983
    %1589 = vst.msk [vmem:[%s8 + $0x60] sm:$0xff] %vm1576, %v984
    %1590 = vst.msk [vmem:[%s8 + $0x68] sm:$0xff] %vm1576, %v985
    %1591 = vst.msk [vmem:[%s8 + $0x70] sm:$0xff] %vm1576, %v986
    %1592 = vst.msk [vmem:[%s8 + $0x78] sm:$0xff] %vm1576, %v987
    %v1593 = vld [vmem:[%s0] sm:$0x1]
    %v1594 = vlaneseq
    %v1595 = vshrl.u32 %v1594, 7
    %v1596 = vlaneseq
    %v1597 = vshrl.u32 %v1596, 7
    %v1598 = vsub.s32 0, %v1597
    %v1599 = vrot.slane %v1593, %v1598
    %vm1600 = vcmp.eq.s32.totalorder %v1599, %v1595
    %v1601 = vsel %vm1600, 1, 0
    %v1602 = vcvt.s32.f32 %v1601
    %1603 = vmatprep.subr.mxu0 0.0
    %1604 = vmatpush1.msra.mxu0 %v1560
    %1605 = vmatprep.subr.mxu0 0.0
    %1606 = vmatpush1.msra.mxu0 %v1561
    %1607 = vmatprep.subr.mxu0 0.0
    %1608 = vmatpush1.msra.mxu0 %v1562
    %1609 = vmatprep.subr.mxu0 0.0
    %1610 = vmatpush1.msra.mxu0 %v1563
    %1611 = vmatprep.subr.mxu0 0.0
    %1612 = vmatpush1.msra.mxu0 %v1564
    %1613 = vmatprep.subr.mxu0 0.0
    %1614 = vmatpush1.msra.mxu0 %v1565
    %1615 = vmatprep.subr.mxu0 0.0
    %1616 = vmatpush1.msra.mxu0 %v1566
    %1617 = vmatprep.subr.mxu0 0.0
    %1618 = vmatpush1.msra.mxu0 %v1567
    %1619 = vmatprep.subr.mxu0 0.0
    %1620 = vmatpush1.msra.mxu0 %v1568
    %1621 = vmatprep.subr.mxu0 0.0
    %1622 = vmatpush1.msra.mxu0 %v1569
    %1623 = vmatprep.subr.mxu0 0.0
    %1624 = vmatpush1.msra.mxu0 %v1570
    %1625 = vmatprep.subr.mxu0 0.0
    %1626 = vmatpush1.msra.mxu0 %v1571
    %1627 = vmatprep.subr.mxu0 0.0
    %1628 = vmatpush1.msra.mxu0 %v1572
    %1629 = vmatprep.subr.mxu0 0.0
    %1630 = vmatpush1.msra.mxu0 %v1573
    %1631 = vmatprep.subr.mxu0 0.0
    %1632 = vmatpush1.msra.mxu0 %v1574
    %1633 = vmatprep.subr.mxu0 0.0
    %1634 = vmatpush1.msra.mxu0 %v1575
    %1635 = vmatprep.subr.mxu0 0.0
    %1636 = vmatpush1.msra.mxu0 0.0
    %1637 = vmatprep.subr.mxu0 0.0
    %1638 = vmatpush1.msra.mxu0 0.0
    %1639 = vmatprep.subr.mxu0 0.0
    %1640 = vmatpush1.msra.mxu0 0.0
    %1641 = vmatprep.subr.mxu0 0.0
    %1642 = vmatpush1.msra.mxu0 0.0
    %1643 = vmatprep.subr.mxu0 0.0
    %1644 = vmatpush1.msra.mxu0 0.0
    %1645 = vmatprep.subr.mxu0 0.0
    %1646 = vmatpush1.msra.mxu0 0.0
    %1647 = vmatprep.subr.mxu0 0.0
    %1648 = vmatpush1.msra.mxu0 0.0
    %1649 = vmatprep.subr.mxu0 0.0
    %1650 = vmatpush1.msra.mxu0 0.0
    %1651 = vmatprep.subr.mxu0 0.0
    %1652 = vmatpush1.msra.mxu0 0.0
    %1653 = vmatprep.subr.mxu0 0.0
    %1654 = vmatpush1.msra.mxu0 0.0
    %1655 = vmatprep.subr.mxu0 0.0
    %1656 = vmatpush1.msra.mxu0 0.0
    %1657 = vmatprep.subr.mxu0 0.0
    %1658 = vmatpush1.msra.mxu0 0.0
    %1659 = vmatprep.subr.mxu0 0.0
    %1660 = vmatpush1.msra.mxu0 0.0
    %1661 = vmatprep.subr.mxu0 0.0
    %1662 = vmatpush1.msra.mxu0 0.0
    %1663 = vmatprep.subr.mxu0 0.0
    %1664 = vmatpush1.msra.mxu0 0.0
    %1665 = vmatprep.subr.mxu0 0.0
    %1666 = vmatpush1.msra.mxu0 0.0
    %1667 = vmatprep.mubr.f32.mxu0 0.0
    %1668 = vmatmul.mubr.f32.gmra.mrb[0].mxu0 %v1602
    %v1669 = vpop.f32.mrb[0].mxu0
    %v1670 = vadd.f32 0.0, %v1669
    %v1671 = vpop.f32.mrb[0].mxu0
    %1672 = vdwg.mxu0
    %1673 = vst.msk [vmem:[#allocation2] sm:$0xff] %vm1576, %v1670
    // Predicated region
    $region34: #{tpu_custom_call.1} parent=1 // pred_check
      _
    $region35: #{tpu_custom_call.1} parent=1 // pred_check_branch
      %1675 = sbr.rel (0) target = $region37
    $region36: #{tpu_custom_call.1} parent=1 // pred_region
      _
    $region37: #{tpu_custom_call.1} parent=1 // pred_fallthru
      _
    // Predicated region
    $region38: #{tpu_custom_call.1} parent=1 // pred_check
      _
    $region39: #{tpu_custom_call.1} parent=1 // pred_check_branch
      %1677 = sbr.rel (0) target = $region41
    $region40: #{tpu_custom_call.1} parent=1 // pred_region
      %s1679 = ssub.s32 128, 128
      %1680 = vsyncadd [#allocation3], %s1679
      %s1682 = sshll.u32 [#allocation2], 4
      %s1683 = int_to_ptr.vmem [resolvable:$true] %s1682
      %1685 = dma.vmem_to_hbm [thread:$0]  %s1683, 128, %s9, [#allocation3]
    $region41: #{tpu_custom_call.1} parent=1 // pred_fallthru
      _
    // Predicated region
    $region42: #{tpu_custom_call.1} parent=1 // pred_check
      _
    $region43: #{tpu_custom_call.1} parent=1 // pred_check_branch
      %1687 = sbr.rel (0) target = $region45
    $region44: #{tpu_custom_call.1} parent=1 // pred_region
      _
    $region45: #{tpu_custom_call.1} parent=1 // pred_fallthru
      _
    // Predicated region
    $region46: #{tpu_custom_call.1} parent=1 // pred_check
      _
    $region47: #{tpu_custom_call.1} parent=1 // pred_check_branch
      %1689 = sbr.rel (0) target = $region49
    $region48: #{tpu_custom_call.1} parent=1 // pred_region
      %1690 = dma.done [#allocation3], 128
    $region49: #{tpu_custom_call.1} parent=1 // pred_fallthru
      _
    %1691 = vsyncpa [#allocation3], 1

</llo_original>
